<compile_context>
chip_gen: v6e
topology: v6e:2x2x1
jax: 0.10.0
libtpu: 0.0.40
codegen_flags: <defaults>
</compile_context>

<pallas_src>
import functools

import jax
import jax.numpy as jnp
from jax import lax
from jax.experimental import pallas as pl
from jax.experimental.pallas import tpu as pltpu

BN_EPS = 1e-5
LANE = 128      # vreg lane width   (final output feature padding)
SUBLANE = 8     # f32 sublane width (contraction-dim / graph-row padding)


# ----------------------------------------------------------------------------
# Fused kernel: normalize A  ->  2 x (GCNConv + BN + ReLU)  ->  mean-pool -> fc
# All operands are full-array VMEM blocks; intermediates live in vregs/VMEM.
# ----------------------------------------------------------------------------
def graph_encoder_kernel(a_ref, x_ref, w1_ref, b1_ref, w2_ref, b2_ref,
                         gamma_ref, beta_ref, batch_ref, fcw_ref, fcb_ref,
                         o_ref):
    n = a_ref.shape[0]                       # true node count (never padded)
    inv_n = jnp.float32(1.0 / n)

    # ---- in-kernel GCN normalization (no N x N HBM temporaries) ----
    a = a_ref[...]                                        # bf16 raw in-edge counts (exact)
    deg = jnp.sum(a.astype(jnp.float32), axis=1, keepdims=True) + 1.0   # + self loop
    dinv = lax.rsqrt(deg)                                 # (N, 1) f32, EUP

    gamma = gamma_ref[...]
    beta = beta_ref[...]

    def gcn_bn_relu(h_bf, w_ref, b_ref):
        # X @ W  (bf16 operands, f32 accumulation on the MXU)
        xw = jnp.dot(h_bf, w_ref[...], preferred_element_type=jnp.float32)
        # A_norm @ XW = D^-1/2 (A_raw + I) D^-1/2 @ XW
        #             = dinv * (A_raw @ (dinv*XW) + dinv*XW)    -- no transpose
        s = dinv * xw
        z = dinv * (jnp.dot(a, s.astype(jnp.bfloat16),
                            preferred_element_type=jnp.float32) + s) + b_ref[...]
        # BatchNorm1d over nodes: training-mode stats, biased two-pass variance, f32.
        mean = jnp.sum(z, axis=0, keepdims=True) * inv_n
        zc = z - mean
        var = jnp.sum(zc * zc, axis=0, keepdims=True) * inv_n
        zn = zc * lax.rsqrt(var + BN_EPS)
        return jnp.maximum(zn * gamma + beta, 0.0)        # shared affine + ReLU

    h = gcn_bn_relu(x_ref[...], w1_ref, b1_ref)                  # layer 1
    h = gcn_bn_relu(h.astype(jnp.bfloat16), w2_ref, b2_ref)      # layer 2 (shared bn1)

    # ---- global_mean_pool in-kernel: one-hot(batch) matmul + count divide ----
    g_pad = o_ref.shape[0]
    g_ids = lax.broadcasted_iota(jnp.int32, (g_pad, n), 0)
    onehot = (g_ids == batch_ref[...]).astype(jnp.float32)       # (G_pad, N)
    counts = jnp.sum(onehot, axis=1, keepdims=True)              # true graph sizes
    pooled = jnp.dot(onehot.astype(jnp.bfloat16), h.astype(jnp.bfloat16),
                     preferred_element_type=jnp.float32)
    pooled = pooled / jnp.maximum(counts, 1.0)

    # ---- final Linear; (8-sublane, 128-lane)-dense output -> unmasked store ----
    o_ref[...] = jnp.dot(pooled.astype(jnp.bfloat16), fcw_ref[...],
                         preferred_element_type=jnp.float32) + fcb_ref[...]


# ----------------------------------------------------------------------------
# Padding helpers (zero padding is exactly semantics-preserving; gamma pads to 1).
# ----------------------------------------------------------------------------
def _round_up(v, m):
    return ((v + m - 1) // m) * m


def _pad_axis(x, axis, new_size, value=0.0):
    pad = new_size - x.shape[axis]
    if pad <= 0:
        return x
    widths = [(0, 0)] * x.ndim
    widths[axis] = (0, pad)
    return jnp.pad(x, widths, constant_values=value)


def prepare_params(params):
    """One-time parameter prep (hoisted out of the per-call forward):
    pad contraction dims only to a multiple of 8, the final output dim to the
    128-lane width, and cast matmul operands to bf16."""
    assert len(params["convs"]) == 2, "fused kernel is written for num_layers=2"
    (w1, b1), (w2, b2) = params["convs"]
    fin, H = w1.shape
    O = params["fc_w"].shape[1]
    fin_p = _round_up(fin, SUBLANE)
    h_p = _round_up(H, SUBLANE)
    o_p = _round_up(O, LANE)
    pad2 = lambda w, r, c: _pad_axis(_pad_axis(w, 0, r), 1, c)
    return {
        "w1": pad2(w1, fin_p, h_p).astype(jnp.bfloat16),
        "b1": _pad_axis(b1.reshape(1, -1), 1, h_p).astype(jnp.float32),
        "w2": pad2(w2, h_p, h_p).astype(jnp.bfloat16),
        "b2": _pad_axis(b2.reshape(1, -1), 1, h_p).astype(jnp.float32),
        "gamma": _pad_axis(params["bn_gamma"].reshape(1, -1), 1, h_p, 1.0).astype(jnp.float32),
        "beta": _pad_axis(params["bn_beta"].reshape(1, -1), 1, h_p).astype(jnp.float32),
        "fc_w": pad2(params["fc_w"], h_p, o_p).astype(jnp.bfloat16),
        "fc_b": _pad_axis(params["fc_b"].reshape(1, -1), 1, o_p).astype(jnp.float32),
    }


# ----------------------------------------------------------------------------
# Plain-JAX glue: only the O(E) scatter-add to a RAW dense adjacency remains.
# ----------------------------------------------------------------------------
def build_raw_adj(edge_index, num_nodes):
    src, dst = edge_index[0], edge_index[1]
    mask = (src < num_nodes) & (dst < num_nodes)     # mask step from forward()
    w = mask.astype(jnp.float32)
    src_c = jnp.where(mask, src, 0)
    dst_c = jnp.where(mask, dst, 0)
    # A[i, j] accumulates edges j -> i (source -> target aggregation).
    return jnp.zeros((num_nodes, num_nodes), jnp.float32).at[dst_c, src_c].add(w)


# ----------------------------------------------------------------------------
# Forward: one fused pallas_call, full-array VMEM blocks, no grid (toy size).
# ----------------------------------------------------------------------------
def graph_encoder_forward(x, edge_index, batch, prep, *, num_graphs, out_dim):
    N, _ = x.shape
    fin_p = prep["w1"].shape[0]
    o_p = prep["fc_w"].shape[1]
    g_pad = _round_up(num_graphs, SUBLANE)

    # Per-call activation prep only (params were padded / cast once).
    a_raw = build_raw_adj(edge_index, N).astype(jnp.bfloat16)   # small integer counts: exact
    x_p = _pad_axis(x, 1, fin_p).astype(jnp.bfloat16)
    batch2d = batch.reshape(1, N).astype(jnp.int32)

    vmem = pl.BlockSpec(memory_space=pltpu.MemorySpace.VMEM)
    out_p = pl.pallas_call(
        graph_encoder_kernel,
        out_shape=jax.ShapeDtypeStruct((g_pad, o_p), jnp.float32),
        in_specs=[vmem] * 11,
        out_specs=vmem,
    )(a_raw, x_p, prep["w1"], prep["b1"], prep["w2"], prep["b2"],
      prep["gamma"], prep["beta"], batch2d, prep["fc_w"], prep["fc_b"])

    return out_p[:num_graphs, :out_dim]     # drop sublane/lane padding


# Pure-JAX reference mirroring the kernel's bf16-matmul / f32-elementwise math.
def graph_encoder_reference(x, edge_index, batch, params, num_graphs):
    N = x.shape[0]
    a = build_raw_adj(edge_index, N).astype(jnp.bfloat16)
    deg = jnp.sum(a.astype(jnp.float32), axis=1, keepdims=True) + 1.0
    dinv = lax.rsqrt(deg)
    h = x.astype(jnp.bfloat16)
    for (w, b) in params["convs"]:
        xw = jnp.dot(h, w.astype(jnp.bfloat16), preferred_element_type=jnp.float32)
        s = dinv * xw
        z = dinv * (jnp.dot(a, s.astype(jnp.bfloat16),
                            preferred_element_type=jnp.float32) + s) + b[None, :]
        mean = jnp.mean(z, axis=0, keepdims=True)
        zc = z - mean
        var = jnp.mean(zc * zc, axis=0, keepdims=True)
        zn = zc * lax.rsqrt(var + BN_EPS)
        h32 = jnp.maximum(zn * params["bn_gamma"][None, :] + params["bn_beta"][None, :], 0.0)
        h = h32.astype(jnp.bfloat16)
    onehot = (batch[None, :] == jnp.arange(num_graphs)[:, None]).astype(jnp.float32)
    counts = jnp.sum(onehot, axis=1, keepdims=True)
    pooled = jnp.dot(onehot.astype(jnp.bfloat16), h,
                     preferred_element_type=jnp.float32) / jnp.maximum(counts, 1.0)
    return jnp.dot(pooled.astype(jnp.bfloat16), params["fc_w"].astype(jnp.bfloat16),
                   preferred_element_type=jnp.float32) + params["fc_b"][None, :]


if __name__ == "__main__":
    # 8 graphs x 16 nodes packed into one call -> matmul M dim fills 128 MXU rows.
    N = 128
    INPUT_DIM = 8
    HIDDEN_DIM = 32
    OUTPUT_DIM = 16
    E = 512
    NUM_GRAPHS = 8

    key = jax.random.PRNGKey(0)
    ks = jax.random.split(key, 10)

    # Deterministic synthetic parameters (no checkpoint load).
    w0 = 0.1 * jax.random.normal(ks[0], (INPUT_DIM, HIDDEN_DIM), jnp.float32)
    b0 = 0.1 * jax.random.normal(ks[1], (HIDDEN_DIM,), jnp.float32)
    w1 = 0.1 * jax.random.normal(ks[2], (HIDDEN_DIM, HIDDEN_DIM), jnp.float32)
    b1 = 0.1 * jax.random.normal(ks[3], (HIDDEN_DIM,), jnp.float32)
    fc_w = 0.1 * jax.random.normal(ks[4], (HIDDEN_DIM, OUTPUT_DIM), jnp.float32)
    fc_b = 0.1 * jax.random.normal(ks[5], (OUTPUT_DIM,), jnp.float32)
    params = {
        "convs": [(w0, b0), (w1, b1)],   # num_layers = 2
        "bn_gamma": jnp.ones((HIDDEN_DIM,), jnp.float32),   # shared bn1
        "bn_beta": jnp.zeros((HIDDEN_DIM,), jnp.float32),
        "fc_w": fc_w,
        "fc_b": fc_b,
    }

    # Inputs.
    x = jax.random.normal(ks[6], (N, INPUT_DIM), jnp.float32)
    # Some edge indices exceed N so the mask in forward() actually drops edges.
    edge_index = jax.random.randint(ks[7], (2, E), 0, N + 8, dtype=jnp.int32)
    batch = jnp.repeat(jnp.arange(NUM_GRAPHS, dtype=jnp.int32), N // NUM_GRAPHS)

    prep = prepare_params(params)        # hoisted: padding/bf16 cast done ONCE
    fwd = jax.jit(functools.partial(graph_encoder_forward,
                                    num_graphs=NUM_GRAPHS, out_dim=OUTPUT_DIM))

    out = jax.block_until_ready(fwd(x, edge_index, batch, prep))
    assert out.shape == (NUM_GRAPHS, OUTPUT_DIM)

    ref = graph_encoder_reference(x, edge_index, batch, params, NUM_GRAPHS)
    assert jnp.allclose(out, ref, atol=5e-3, rtol=5e-3), (out, ref)

    # TODO(synk): `use_attention` flag is stored but never used in forward(); nothing to implement.
    print("KERNEL_OK")
</pallas_src>

<mosaic_0001>
module attributes {stable_mosaic.version = 11 : i64} {
  func.func private @main(%arg0: i32) attributes {dimension_semantics = [#tpu.dimension_semantics<core_parallel>], iteration_bounds = array<i64: 2>, tpu.core_type = #tpu.core_type<sc_scalar_subcore>, window_params = []} {
    return
  }
}

module attributes {stable_mosaic.version = 11 : i64} {
  func.func private @main(%arg0: i32) attributes {dimension_semantics = [#tpu.dimension_semantics<core_parallel>], iteration_bounds = array<i64: 2>, tpu.core_type = #tpu.core_type<sc_scalar_subcore>, window_params = []} {
    return
  }
}

module attributes {stable_mosaic.version = 11 : i64} {
  func.func @graph_encoder_kernel(%arg0: memref<128x128xbf16, #tpu.memory_space<vmem>>, %arg1: memref<128x8xbf16, #tpu.memory_space<vmem>>, %arg2: memref<8x32xbf16, #tpu.memory_space<vmem>>, %arg3: memref<1x32xf32, #tpu.memory_space<vmem>>, %arg4: memref<32x32xbf16, #tpu.memory_space<vmem>>, %arg5: memref<1x32xf32, #tpu.memory_space<vmem>>, %arg6: memref<1x32xf32, #tpu.memory_space<vmem>>, %arg7: memref<1x32xf32, #tpu.memory_space<vmem>>, %arg8: memref<1x128xi32, #tpu.memory_space<vmem>>, %arg9: memref<32x128xbf16, #tpu.memory_space<vmem>>, %arg10: memref<1x128xf32, #tpu.memory_space<vmem>>, %arg11: memref<8x128xf32, #tpu.memory_space<vmem>>) attributes {dimension_semantics = [], scalar_prefetch = 0 : i64, scratch_operands = 0 : i64, tpu.core_type = #tpu.core_type<tc>} {
    %c0 = arith.constant 0 : index
    %c0_0 = arith.constant 0 : index
    %0 = vector.load %arg0[%c0, %c0_0] : memref<128x128xbf16, #tpu.memory_space<vmem>>, vector<128x128xbf16>
    %1 = arith.extf %0 : vector<128x128xbf16> to vector<128x128xf32>
    %cst = arith.constant dense<0.000000e+00> : vector<128xf32>
    %2 = vector.multi_reduction <add>, %1, %cst [1] : vector<128x128xf32> to vector<128xf32>
    %3 = vector.shape_cast %2 : vector<128xf32> to vector<128x1xf32>
    %cst_1 = arith.constant 1.000000e+00 : f32
    %4 = vector.broadcast %cst_1 : f32 to vector<128x1xf32>
    %5 = arith.addf %3, %4 : vector<128x1xf32>
    %6 = math.rsqrt %5 : vector<128x1xf32>
    %c0_2 = arith.constant 0 : index
    %c0_3 = arith.constant 0 : index
    %7 = vector.load %arg6[%c0_2, %c0_3] : memref<1x32xf32, #tpu.memory_space<vmem>>, vector<1x32xf32>
    %c0_4 = arith.constant 0 : index
    %c0_5 = arith.constant 0 : index
    %8 = vector.load %arg7[%c0_4, %c0_5] : memref<1x32xf32, #tpu.memory_space<vmem>>, vector<1x32xf32>
    %c0_6 = arith.constant 0 : index
    %c0_7 = arith.constant 0 : index
    %9 = vector.load %arg1[%c0_6, %c0_7] : memref<128x8xbf16, #tpu.memory_space<vmem>>, vector<128x8xbf16>
    %c0_8 = arith.constant 0 : index
    %c0_9 = arith.constant 0 : index
    %10 = vector.load %arg2[%c0_8, %c0_9] : memref<8x32xbf16, #tpu.memory_space<vmem>>, vector<8x32xbf16>
    %cst_10 = arith.constant dense<0.000000e+00> : vector<128x32xf32>
    %11 = tpu.matmul %9, %10, %cst_10 {dimension_numbers = #tpu.dot_dimension_numbers<[1], [0], [0], [1], [0, 0, 1, 1], [], []>} : vector<128x8xbf16>, vector<8x32xbf16>, vector<128x32xf32> -> vector<128x32xf32>
    %12 = vector.broadcast %6 : vector<128x1xf32> to vector<128x32xf32>
    %13 = arith.mulf %12, %11 : vector<128x32xf32>
    %14 = arith.truncf %13 : vector<128x32xf32> to vector<128x32xbf16>
    %cst_11 = arith.constant dense<0.000000e+00> : vector<128x32xf32>
    %15 = tpu.matmul %0, %14, %cst_11 {dimension_numbers = #tpu.dot_dimension_numbers<[1], [0], [0], [1], [0, 0, 1, 1], [], []>} : vector<128x128xbf16>, vector<128x32xbf16>, vector<128x32xf32> -> vector<128x32xf32>
    %16 = arith.addf %15, %13 : vector<128x32xf32>
    %17 = vector.broadcast %6 : vector<128x1xf32> to vector<128x32xf32>
    %18 = arith.mulf %17, %16 : vector<128x32xf32>
    %c0_12 = arith.constant 0 : index
    %c0_13 = arith.constant 0 : index
    %19 = vector.load %arg3[%c0_12, %c0_13] : memref<1x32xf32, #tpu.memory_space<vmem>>, vector<1x32xf32>
    %20 = vector.broadcast %19 : vector<1x32xf32> to vector<128x32xf32>
    %21 = arith.addf %18, %20 : vector<128x32xf32>
    %cst_14 = arith.constant dense<0.000000e+00> : vector<32xf32>
    %22 = vector.multi_reduction <add>, %21, %cst_14 [0] : vector<128x32xf32> to vector<32xf32>
    %23 = vector.shape_cast %22 : vector<32xf32> to vector<1x32xf32>
    %cst_15 = arith.constant 7.812500e-03 : f32
    %24 = vector.broadcast %cst_15 : f32 to vector<1x32xf32>
    %25 = arith.mulf %23, %24 : vector<1x32xf32>
    %26 = vector.broadcast %25 : vector<1x32xf32> to vector<128x32xf32>
    %27 = arith.subf %21, %26 : vector<128x32xf32>
    %28 = arith.mulf %27, %27 : vector<128x32xf32>
    %cst_16 = arith.constant dense<0.000000e+00> : vector<32xf32>
    %29 = vector.multi_reduction <add>, %28, %cst_16 [0] : vector<128x32xf32> to vector<32xf32>
    %30 = vector.shape_cast %29 : vector<32xf32> to vector<1x32xf32>
    %cst_17 = arith.constant 7.812500e-03 : f32
    %31 = vector.broadcast %cst_17 : f32 to vector<1x32xf32>
    %32 = arith.mulf %30, %31 : vector<1x32xf32>
    %cst_18 = arith.constant 9.99999974E-6 : f32
    %33 = vector.broadcast %cst_18 : f32 to vector<1x32xf32>
    %34 = arith.addf %32, %33 : vector<1x32xf32>
    %35 = math.rsqrt %34 : vector<1x32xf32>
    %36 = vector.broadcast %35 : vector<1x32xf32> to vector<128x32xf32>
    %37 = arith.mulf %27, %36 : vector<128x32xf32>
    %38 = vector.broadcast %7 : vector<1x32xf32> to vector<128x32xf32>
    %39 = arith.mulf %37, %38 : vector<128x32xf32>
    %40 = vector.broadcast %8 : vector<1x32xf32> to vector<128x32xf32>
    %41 = arith.addf %39, %40 : vector<128x32xf32>
    %cst_19 = arith.constant 0.000000e+00 : f32
    %42 = vector.broadcast %cst_19 : f32 to vector<128x32xf32>
    %43 = arith.maximumf %41, %42 : vector<128x32xf32>
    %44 = arith.truncf %43 : vector<128x32xf32> to vector<128x32xbf16>
    %c0_20 = arith.constant 0 : index
    %c0_21 = arith.constant 0 : index
    %45 = vector.load %arg4[%c0_20, %c0_21] : memref<32x32xbf16, #tpu.memory_space<vmem>>, vector<32x32xbf16>
    %cst_22 = arith.constant dense<0.000000e+00> : vector<128x32xf32>
    %46 = tpu.matmul %44, %45, %cst_22 {dimension_numbers = #tpu.dot_dimension_numbers<[1], [0], [0], [1], [0, 0, 1, 1], [], []>} : vector<128x32xbf16>, vector<32x32xbf16>, vector<128x32xf32> -> vector<128x32xf32>
    %47 = vector.broadcast %6 : vector<128x1xf32> to vector<128x32xf32>
    %48 = arith.mulf %47, %46 : vector<128x32xf32>
    %49 = arith.truncf %48 : vector<128x32xf32> to vector<128x32xbf16>
    %cst_23 = arith.constant dense<0.000000e+00> : vector<128x32xf32>
    %50 = tpu.matmul %0, %49, %cst_23 {dimension_numbers = #tpu.dot_dimension_numbers<[1], [0], [0], [1], [0, 0, 1, 1], [], []>} : vector<128x128xbf16>, vector<128x32xbf16>, vector<128x32xf32> -> vector<128x32xf32>
    %51 = arith.addf %50, %48 : vector<128x32xf32>
    %52 = vector.broadcast %6 : vector<128x1xf32> to vector<128x32xf32>
    %53 = arith.mulf %52, %51 : vector<128x32xf32>
    %c0_24 = arith.constant 0 : index
    %c0_25 = arith.constant 0 : index
    %54 = vector.load %arg5[%c0_24, %c0_25] : memref<1x32xf32, #tpu.memory_space<vmem>>, vector<1x32xf32>
    %55 = vector.broadcast %54 : vector<1x32xf32> to vector<128x32xf32>
    %56 = arith.addf %53, %55 : vector<128x32xf32>
    %cst_26 = arith.constant dense<0.000000e+00> : vector<32xf32>
    %57 = vector.multi_reduction <add>, %56, %cst_26 [0] : vector<128x32xf32> to vector<32xf32>
    %58 = vector.shape_cast %57 : vector<32xf32> to vector<1x32xf32>
    %cst_27 = arith.constant 7.812500e-03 : f32
    %59 = vector.broadcast %cst_27 : f32 to vector<1x32xf32>
    %60 = arith.mulf %58, %59 : vector<1x32xf32>
    %61 = vector.broadcast %60 : vector<1x32xf32> to vector<128x32xf32>
    %62 = arith.subf %56, %61 : vector<128x32xf32>
    %63 = arith.mulf %62, %62 : vector<128x32xf32>
    %cst_28 = arith.constant dense<0.000000e+00> : vector<32xf32>
    %64 = vector.multi_reduction <add>, %63, %cst_28 [0] : vector<128x32xf32> to vector<32xf32>
    %65 = vector.shape_cast %64 : vector<32xf32> to vector<1x32xf32>
    %cst_29 = arith.constant 7.812500e-03 : f32
    %66 = vector.broadcast %cst_29 : f32 to vector<1x32xf32>
    %67 = arith.mulf %65, %66 : vector<1x32xf32>
    %cst_30 = arith.constant 9.99999974E-6 : f32
    %68 = vector.broadcast %cst_30 : f32 to vector<1x32xf32>
    %69 = arith.addf %67, %68 : vector<1x32xf32>
    %70 = math.rsqrt %69 : vector<1x32xf32>
    %71 = vector.broadcast %70 : vector<1x32xf32> to vector<128x32xf32>
    %72 = arith.mulf %62, %71 : vector<128x32xf32>
    %73 = vector.broadcast %7 : vector<1x32xf32> to vector<128x32xf32>
    %74 = arith.mulf %72, %73 : vector<128x32xf32>
    %75 = vector.broadcast %8 : vector<1x32xf32> to vector<128x32xf32>
    %76 = arith.addf %74, %75 : vector<128x32xf32>
    %cst_31 = arith.constant 0.000000e+00 : f32
    %77 = vector.broadcast %cst_31 : f32 to vector<128x32xf32>
    %78 = arith.maximumf %76, %77 : vector<128x32xf32>
    %79 = tpu.iota {dimensions = array<i32: 0>} : vector<8x128xi32>
    %c0_32 = arith.constant 0 : index
    %c0_33 = arith.constant 0 : index
    %80 = vector.load %arg8[%c0_32, %c0_33] : memref<1x128xi32, #tpu.memory_space<vmem>>, vector<1x128xi32>
    %81 = vector.broadcast %80 : vector<1x128xi32> to vector<8x128xi32>
    %82 = arith.cmpi eq, %79, %81 : vector<8x128xi32>
    %83 = arith.extui %82 : vector<8x128xi1> to vector<8x128xi32>
    %84 = arith.sitofp %83 : vector<8x128xi32> to vector<8x128xf32>
    %cst_34 = arith.constant dense<0.000000e+00> : vector<8xf32>
    %85 = vector.multi_reduction <add>, %84, %cst_34 [1] : vector<8x128xf32> to vector<8xf32>
    %86 = vector.shape_cast %85 : vector<8xf32> to vector<8x1xf32>
    %87 = arith.truncf %84 : vector<8x128xf32> to vector<8x128xbf16>
    %88 = arith.truncf %78 : vector<128x32xf32> to vector<128x32xbf16>
    %cst_35 = arith.constant dense<0.000000e+00> : vector<8x32xf32>
    %89 = tpu.matmul %87, %88, %cst_35 {dimension_numbers = #tpu.dot_dimension_numbers<[1], [0], [0], [1], [0, 0, 1, 1], [], []>} : vector<8x128xbf16>, vector<128x32xbf16>, vector<8x32xf32> -> vector<8x32xf32>
    %cst_36 = arith.constant 1.000000e+00 : f32
    %90 = vector.broadcast %cst_36 : f32 to vector<8x1xf32>
    %91 = arith.maximumf %86, %90 : vector<8x1xf32>
    %92 = vector.broadcast %91 : vector<8x1xf32> to vector<8x32xf32>
    %93 = arith.divf %89, %92 : vector<8x32xf32>
    %94 = arith.truncf %93 : vector<8x32xf32> to vector<8x32xbf16>
    %c0_37 = arith.constant 0 : index
    %c0_38 = arith.constant 0 : index
    %95 = vector.load %arg9[%c0_37, %c0_38] : memref<32x128xbf16, #tpu.memory_space<vmem>>, vector<32x128xbf16>
    %cst_39 = arith.constant dense<0.000000e+00> : vector<8x128xf32>
    %96 = tpu.matmul %94, %95, %cst_39 {dimension_numbers = #tpu.dot_dimension_numbers<[1], [0], [0], [1], [0, 0, 1, 1], [], []>} : vector<8x32xbf16>, vector<32x128xbf16>, vector<8x128xf32> -> vector<8x128xf32>
    %c0_40 = arith.constant 0 : index
    %c0_41 = arith.constant 0 : index
    %97 = vector.load %arg10[%c0_40, %c0_41] : memref<1x128xf32, #tpu.memory_space<vmem>>, vector<1x128xf32>
    %98 = vector.broadcast %97 : vector<1x128xf32> to vector<8x128xf32>
    %99 = arith.addf %96, %98 : vector<8x128xf32>
    %c0_42 = arith.constant 0 : index
    %c0_43 = arith.constant 0 : index
    %100 = vector.load %arg11[%c0_42, %c0_43] : memref<8x128xf32, #tpu.memory_space<vmem>>, vector<8x128xf32>
    tpu.vector_store %arg11[%c0_42, %c0_43], %99 {strides = array<i32>} : memref<8x128xf32, #tpu.memory_space<vmem>>, vector<8x128xf32>,
    return
  }
}

</mosaic_0001>

<llo_original>
// kernel: graph_encoder_forward.1
$region0: #{graph_encoder_forward.1}
  #allocation0 [shape = 'u32[]', space=smem, size = 0x4, offset = 0x4, fixed_abs, tag = 'smem constant byte address 0x4 - core index']
  #allocation1 [shape = 'u32[144,128]{1,0:T(1,128)}', space=vmem, size = 0x12000, scoped, tag = 'internal scratch']
  %s0 = inlined_call_operand.vmem [shape: bf16[128,128], index: 0, kind: input, shape index: {}]
  %s1 = inlined_call_operand.vmem [shape: bf16[128,8], index: 1, kind: input, shape index: {}]
  %s2 = inlined_call_operand.vmem [shape: bf16[8,32], index: 2, kind: input, shape index: {}]
  %s3 = inlined_call_operand.vmem [shape: f32[1,32], index: 3, kind: input, shape index: {}]
  %s4 = inlined_call_operand.vmem [shape: bf16[32,32], index: 4, kind: input, shape index: {}]
  %s5 = inlined_call_operand.vmem [shape: f32[1,32], index: 5, kind: input, shape index: {}]
  %s6 = inlined_call_operand.vmem [shape: f32[1,32], index: 6, kind: input, shape index: {}]
  %s7 = inlined_call_operand.vmem [shape: f32[1,32], index: 7, kind: input, shape index: {}]
  %s8 = inlined_call_operand.vmem [shape: s32[1,128], index: 8, kind: input, shape index: {}]
  %s9 = inlined_call_operand.vmem [shape: bf16[32,128], index: 9, kind: input, shape index: {}]
  %s10 = inlined_call_operand.vmem [shape: f32[1,128], index: 10, kind: input, shape index: {}]
  %s11 = inlined_call_operand.hbm [shape: f32[8,128], index: 11, kind: output, shape index: {}]
  %s12 = sld [smem:[#allocation0]]
  $region54: #{graph_encoder_forward.1} parent=0
    _
  %s14 = ssub.s32 1, %s12
  %s15 = scalar_select 0, %s14, %s12
  $region1: #{graph_encoder_forward.1} parent=0
    #allocation2 [shape = 'u8[4096]{0}', space=vmem, size = 0x1000, scoped, tag = 'output window, operand 0, single buffered']
    #allocation3 [shape = 's32[1]{0}', space=sflag, size = 0x4, scoped, tag = 'scoped memory for graph_encoder_forward.1']
    %16 = vsyncpa [#allocation3], 0
    // Predicated region
    $region2: #{graph_encoder_forward.1} parent=1 // pred_check
      _
    $region3: #{graph_encoder_forward.1} parent=1 // pred_check_branch
      %18 = sbr.rel (0) target = $region5
    $region4: #{graph_encoder_forward.1} parent=1 // pred_region
      _
    $region5: #{graph_encoder_forward.1} parent=1 // pred_fallthru
      _
    // Predicated region
    $region6: #{graph_encoder_forward.1} parent=1 // pred_check
      _
    $region7: #{graph_encoder_forward.1} parent=1 // pred_check_branch
      %20 = sbr.rel (0) target = $region9
    $region8: #{graph_encoder_forward.1} parent=1 // pred_region
      _
    $region9: #{graph_encoder_forward.1} parent=1 // pred_fallthru
      _
    // Predicated region
    $region10: #{graph_encoder_forward.1} parent=1 // pred_check
      _
    $region11: #{graph_encoder_forward.1} parent=1 // pred_check_branch
      %22 = sbr.rel (0) target = $region13
    $region12: #{graph_encoder_forward.1} parent=1 // pred_region
      _
    $region13: #{graph_encoder_forward.1} parent=1 // pred_fallthru
      _
    // Predicated region
    $region14: #{graph_encoder_forward.1} parent=1 // pred_check
      _
    $region15: #{graph_encoder_forward.1} parent=1 // pred_check_branch
      %24 = sbr.rel (0) target = $region17
    $region16: #{graph_encoder_forward.1} parent=1 // pred_region
      _
    $region17: #{graph_encoder_forward.1} parent=1 // pred_fallthru
      _
    // Predicated region
    $region18: #{graph_encoder_forward.1} parent=1 // pred_check
      _
    $region19: #{graph_encoder_forward.1} parent=1 // pred_check_branch
      %26 = sbr.rel (0) target = $region21
    $region20: #{graph_encoder_forward.1} parent=1 // pred_region
      _
    $region21: #{graph_encoder_forward.1} parent=1 // pred_fallthru
      _
    // Predicated region
    $region22: #{graph_encoder_forward.1} parent=1 // pred_check
      _
    $region23: #{graph_encoder_forward.1} parent=1 // pred_check_branch
      %28 = sbr.rel (0) target = $region25
    $region24: #{graph_encoder_forward.1} parent=1 // pred_region
      _
    $region25: #{graph_encoder_forward.1} parent=1 // pred_fallthru
      _
    // Predicated region
    $region26: #{graph_encoder_forward.1} parent=1 // pred_check
      _
    $region27: #{graph_encoder_forward.1} parent=1 // pred_check_branch
      %30 = sbr.rel (0) target = $region29
    $region28: #{graph_encoder_forward.1} parent=1 // pred_region
      _
    $region29: #{graph_encoder_forward.1} parent=1 // pred_fallthru
      _
    // Predicated region
    $region30: #{graph_encoder_forward.1} parent=1 // pred_check
      _
    $region31: #{graph_encoder_forward.1} parent=1 // pred_check_branch
      %32 = sbr.rel (0) target = $region33
    $region32: #{graph_encoder_forward.1} parent=1 // pred_region
      _
    $region33: #{graph_encoder_forward.1} parent=1 // pred_fallthru
      _
    // Predicated region
    $region34: #{graph_encoder_forward.1} parent=1 // pred_check
      _
    $region35: #{graph_encoder_forward.1} parent=1 // pred_check_branch
      %34 = sbr.rel (0) target = $region37
    $region36: #{graph_encoder_forward.1} parent=1 // pred_region
      _
    $region37: #{graph_encoder_forward.1} parent=1 // pred_fallthru
      _
    // Predicated region
    $region38: #{graph_encoder_forward.1} parent=1 // pred_check
      _
    $region39: #{graph_encoder_forward.1} parent=1 // pred_check_branch
      %36 = sbr.rel (0) target = $region41
    $region40: #{graph_encoder_forward.1} parent=1 // pred_region
      _
    $region41: #{graph_encoder_forward.1} parent=1 // pred_fallthru
      _
    // Predicated region
    $region42: #{graph_encoder_forward.1} parent=1 // pred_check
      _
    $region43: #{graph_encoder_forward.1} parent=1 // pred_check_branch
      %38 = sbr.rel (0) target = $region45
    $region44: #{graph_encoder_forward.1} parent=1 // pred_region
      _
    $region45: #{graph_encoder_forward.1} parent=1 // pred_fallthru
      _
    %v40 = vld [vmem:[%s0] sm:$0xf]
    %v41 = vld [vmem:[%s0 + $0x4] sm:$0xf]
    %v42 = vld [vmem:[%s0 + $0x8] sm:$0xf]
    %v43 = vld [vmem:[%s0 + $0xc] sm:$0xf]
    %v44 = vld [vmem:[%s0 + $0x10] sm:$0xf]
    %v45 = vld [vmem:[%s0 + $0x14] sm:$0xf]
    %v46 = vld [vmem:[%s0 + $0x18] sm:$0xf]
    %v47 = vld [vmem:[%s0 + $0x1c] sm:$0xf]
    %v48 = vld [vmem:[%s0 + $0x20] sm:$0xf]
    %v49 = vld [vmem:[%s0 + $0x24] sm:$0xf]
    %v50 = vld [vmem:[%s0 + $0x28] sm:$0xf]
    %v51 = vld [vmem:[%s0 + $0x2c] sm:$0xf]
    %v52 = vld [vmem:[%s0 + $0x30] sm:$0xf]
    %v53 = vld [vmem:[%s0 + $0x34] sm:$0xf]
    %v54 = vld [vmem:[%s0 + $0x38] sm:$0xf]
    %v55 = vld [vmem:[%s0 + $0x3c] sm:$0xf]
    %v56 = vunpack.c.l.bf16 %v40
    %v57 = vunpack.c.l.bf16 %v41
    %v58 = vunpack.c.l.bf16 %v42
    %v59 = vunpack.c.l.bf16 %v43
    %v60 = vunpack.c.l.bf16 %v44
    %v61 = vunpack.c.l.bf16 %v45
    %v62 = vunpack.c.l.bf16 %v46
    %v63 = vunpack.c.l.bf16 %v47
    %v64 = vunpack.c.l.bf16 %v48
    %v65 = vunpack.c.l.bf16 %v49
    %v66 = vunpack.c.l.bf16 %v50
    %v67 = vunpack.c.l.bf16 %v51
    %v68 = vunpack.c.l.bf16 %v52
    %v69 = vunpack.c.l.bf16 %v53
    %v70 = vunpack.c.l.bf16 %v54
    %v71 = vunpack.c.l.bf16 %v55
    %72 = vadd.xlane.f32.xlu0 %v56
    %v73 = vpop.xlane.xlu0 %72
    %74 = vadd.xlane.f32.xlu0 %v57
    %v75 = vpop.xlane.xlu0 %74
    %76 = vadd.xlane.f32.xlu0 %v58
    %v77 = vpop.xlane.xlu0 %76
    %78 = vadd.xlane.f32.xlu0 %v59
    %v79 = vpop.xlane.xlu0 %78
    %80 = vadd.xlane.f32.xlu0 %v60
    %v81 = vpop.xlane.xlu0 %80
    %82 = vadd.xlane.f32.xlu0 %v61
    %v83 = vpop.xlane.xlu0 %82
    %84 = vadd.xlane.f32.xlu0 %v62
    %v85 = vpop.xlane.xlu0 %84
    %86 = vadd.xlane.f32.xlu0 %v63
    %v87 = vpop.xlane.xlu0 %86
    %88 = vadd.xlane.f32.xlu0 %v64
    %v89 = vpop.xlane.xlu0 %88
    %90 = vadd.xlane.f32.xlu0 %v65
    %v91 = vpop.xlane.xlu0 %90
    %92 = vadd.xlane.f32.xlu0 %v66
    %v93 = vpop.xlane.xlu0 %92
    %94 = vadd.xlane.f32.xlu0 %v67
    %v95 = vpop.xlane.xlu0 %94
    %96 = vadd.xlane.f32.xlu0 %v68
    %v97 = vpop.xlane.xlu0 %96
    %98 = vadd.xlane.f32.xlu0 %v69
    %v99 = vpop.xlane.xlu0 %98
    %100 = vadd.xlane.f32.xlu0 %v70
    %v101 = vpop.xlane.xlu0 %100
    %102 = vadd.xlane.f32.xlu0 %v71
    %v103 = vpop.xlane.xlu0 %102
    %v104 = vadd.f32 %v73, 1.0
    %v105 = vadd.f32 %v75, 1.0
    %v106 = vadd.f32 %v77, 1.0
    %v107 = vadd.f32 %v79, 1.0
    %v108 = vadd.f32 %v81, 1.0
    %v109 = vadd.f32 %v83, 1.0
    %v110 = vadd.f32 %v85, 1.0
    %v111 = vadd.f32 %v87, 1.0
    %v112 = vadd.f32 %v89, 1.0
    %v113 = vadd.f32 %v91, 1.0
    %v114 = vadd.f32 %v93, 1.0
    %v115 = vadd.f32 %v95, 1.0
    %v116 = vadd.f32 %v97, 1.0
    %v117 = vadd.f32 %v99, 1.0
    %v118 = vadd.f32 %v101, 1.0
    %v119 = vadd.f32 %v103, 1.0
    %v120 = vrsqrt.pop %v104
    %v121 = vrsqrt.pop %v105
    %v122 = vrsqrt.pop %v106
    %v123 = vrsqrt.pop %v107
    %v124 = vrsqrt.pop %v108
    %v125 = vrsqrt.pop %v109
    %v126 = vrsqrt.pop %v110
    %v127 = vrsqrt.pop %v111
    %v128 = vrsqrt.pop %v112
    %v129 = vrsqrt.pop %v113
    %v130 = vrsqrt.pop %v114
    %v131 = vrsqrt.pop %v115
    %v132 = vrsqrt.pop %v116
    %v133 = vrsqrt.pop %v117
    %v134 = vrsqrt.pop %v118
    %v135 = vrsqrt.pop %v119
    %v136 = vld [vmem:[%s6] sm:$0x1]
    %v137 = vld [vmem:[%s7] sm:$0x1]
    %v138 = vld [vmem:[%s1] sm:$0xf]
    %v139 = vld [vmem:[%s1 + $0x4] sm:$0xf]
    %v140 = vld [vmem:[%s1 + $0x8] sm:$0xf]
    %v141 = vld [vmem:[%s1 + $0xc] sm:$0xf]
    %v142 = vld [vmem:[%s1 + $0x10] sm:$0xf]
    %v143 = vld [vmem:[%s1 + $0x14] sm:$0xf]
    %v144 = vld [vmem:[%s1 + $0x18] sm:$0xf]
    %v145 = vld [vmem:[%s1 + $0x1c] sm:$0xf]
    %v146 = vld [vmem:[%s1 + $0x20] sm:$0xf]
    %v147 = vld [vmem:[%s1 + $0x24] sm:$0xf]
    %v148 = vld [vmem:[%s1 + $0x28] sm:$0xf]
    %v149 = vld [vmem:[%s1 + $0x2c] sm:$0xf]
    %v150 = vld [vmem:[%s1 + $0x30] sm:$0xf]
    %v151 = vld [vmem:[%s1 + $0x34] sm:$0xf]
    %v152 = vld [vmem:[%s1 + $0x38] sm:$0xf]
    %v153 = vld [vmem:[%s1 + $0x3c] sm:$0xf]
    %v154 = vld [vmem:[%s2] sm:$0xf]
    %v171 = vunpack.c.l.b16 %v138
    %v172 = vunpack.c.l.b16 %v139
    %v173 = vunpack.c.l.b16 %v140
    %v174 = vunpack.c.l.b16 %v141
    %v175 = vunpack.c.l.b16 %v142
    %v176 = vunpack.c.l.b16 %v143
    %v177 = vunpack.c.l.b16 %v144
    %v178 = vunpack.c.l.b16 %v145
    %v179 = vunpack.c.l.b16 %v146
    %v180 = vunpack.c.l.b16 %v147
    %v181 = vunpack.c.l.b16 %v148
    %v182 = vunpack.c.l.b16 %v149
    %v183 = vunpack.c.l.b16 %v150
    %v184 = vunpack.c.l.b16 %v151
    %v185 = vunpack.c.l.b16 %v152
    %v186 = vunpack.c.l.b16 %v153
    %v187 = vpack.c.b16 %v172, %v171
    %v188 = vpack.c.b16 %v174, %v173
    %v189 = vpack.c.b16 %v176, %v175
    %v190 = vpack.c.b16 %v178, %v177
    %v191 = vpack.c.b16 %v180, %v179
    %v192 = vpack.c.b16 %v182, %v181
    %v193 = vpack.c.b16 %v184, %v183
    %v194 = vpack.c.b16 %v186, %v185
    %vm195 = vcmask 64512
    %v197 = vsel %vm195, %v187, 0
    %v200 = vsel %vm195, %v188, 0
    %v203 = vsel %vm195, %v189, 0
    %v206 = vsel %vm195, %v190, 0
    %v209 = vsel %vm195, %v191, 0
    %v212 = vsel %vm195, %v192, 0
    %v215 = vsel %vm195, %v193, 0
    %v218 = vsel %vm195, %v194, 0
    %vm220 = vcmask 1043456
    %v222 = vsel %vm220, %v154, 0
    %224 = vmatprep.subr.bf16.mxu0 0
    %225 = vmatpush1.bf16.msra.mxu0 0
    %226 = vmatprep.subr.bf16.mxu0 0
    %227 = vmatpush1.bf16.msra.mxu0 0
    %228 = vmatprep.subr.bf16.mxu0 0
    %229 = vmatpush1.bf16.msra.mxu0 0
    %230 = vmatprep.subr.bf16.mxu0 0
    %231 = vmatpush1.bf16.msra.mxu0 0
    %232 = vmatprep.subr.bf16.mxu0 0
    %233 = vmatpush1.bf16.msra.mxu0 0
    %234 = vmatprep.subr.bf16.mxu0 0
    %235 = vmatpush1.bf16.msra.mxu0 0
    %236 = vmatprep.subr.bf16.mxu0 0
    %237 = vmatpush1.bf16.msra.mxu0 0
    %238 = vmatprep.subr.bf16.mxu0 0
    %239 = vmatpush1.bf16.msra.mxu0 %v222
    %240 = vmatprep.subr.bf16.mxu0 0
    %241 = vmatpush2.bf16.msra.mxu0 0
    %242 = vmatprep.subr.bf16.mxu0 0
    %243 = vmatpush2.bf16.msra.mxu0 0
    %244 = vmatprep.subr.bf16.mxu0 0
    %245 = vmatpush2.bf16.msra.mxu0 0
    %246 = vmatprep.subr.bf16.mxu0 0
    %247 = vmatpush2.bf16.msra.mxu0 0
    %248 = vmatprep.subr.bf16.mxu0 0
    %249 = vmatpush2.bf16.msra.mxu0 0
    %250 = vmatprep.subr.bf16.mxu0 0
    %251 = vmatpush2.bf16.msra.mxu0 0
    %252 = vmatprep.subr.bf16.mxu0 0
    %253 = vmatpush2.bf16.msra.mxu0 0
    %254 = vmatprep.subr.bf16.mxu0 0
    %255 = vmatpush2.bf16.msra.mxu0 0
    %256 = vmatprep.mubr.bf16.mxu0 0
    %257 = vmatmul.mubr.bf16.gmra.mxu0 %v197
    %v258 = vpop.f32.mrf.mxu0
    %v259 = vadd.f32 0.0, %v258
    %v260 = vpop.f32.mrf.mxu0
    %v261 = vpop.f32.mrf.mxu0
    %v262 = vadd.f32 0.0, %v261
    %v263 = vpop.f32.mrf.mxu0
    %264 = vmatprep.mubr.bf16.mxu0 0
    %265 = vmatmul.mubr.bf16.gmra.mxu0 %v200
    %v266 = vpop.f32.mrf.mxu0
    %v267 = vadd.f32 0.0, %v266
    %v268 = vpop.f32.mrf.mxu0
    %v269 = vpop.f32.mrf.mxu0
    %v270 = vadd.f32 0.0, %v269
    %v271 = vpop.f32.mrf.mxu0
    %272 = vmatprep.mubr.bf16.mxu0 0
    %273 = vmatmul.mubr.bf16.gmra.mxu0 %v203
    %v274 = vpop.f32.mrf.mxu0
    %v275 = vadd.f32 0.0, %v274
    %v276 = vpop.f32.mrf.mxu0
    %v277 = vpop.f32.mrf.mxu0
    %v278 = vadd.f32 0.0, %v277
    %v279 = vpop.f32.mrf.mxu0
    %280 = vmatprep.mubr.bf16.mxu0 0
    %281 = vmatmul.mubr.bf16.gmra.mxu0 %v206
    %v282 = vpop.f32.mrf.mxu0
    %v283 = vadd.f32 0.0, %v282
    %v284 = vpop.f32.mrf.mxu0
    %v285 = vpop.f32.mrf.mxu0
    %v286 = vadd.f32 0.0, %v285
    %v287 = vpop.f32.mrf.mxu0
    %288 = vmatprep.mubr.bf16.mxu0 0
    %289 = vmatmul.mubr.bf16.gmra.mxu0 %v209
    %v290 = vpop.f32.mrf.mxu0
    %v291 = vadd.f32 0.0, %v290
    %v292 = vpop.f32.mrf.mxu0
    %v293 = vpop.f32.mrf.mxu0
    %v294 = vadd.f32 0.0, %v293
    %v295 = vpop.f32.mrf.mxu0
    %296 = vmatprep.mubr.bf16.mxu0 0
    %297 = vmatmul.mubr.bf16.gmra.mxu0 %v212
    %v298 = vpop.f32.mrf.mxu0
    %v299 = vadd.f32 0.0, %v298
    %v300 = vpop.f32.mrf.mxu0
    %v301 = vpop.f32.mrf.mxu0
    %v302 = vadd.f32 0.0, %v301
    %v303 = vpop.f32.mrf.mxu0
    %304 = vmatprep.mubr.bf16.mxu0 0
    %305 = vmatmul.mubr.bf16.gmra.mxu0 %v215
    %v306 = vpop.f32.mrf.mxu0
    %v307 = vadd.f32 0.0, %v306
    %v308 = vpop.f32.mrf.mxu0
    %v309 = vpop.f32.mrf.mxu0
    %v310 = vadd.f32 0.0, %v309
    %v311 = vpop.f32.mrf.mxu0
    %312 = vmatprep.mubr.bf16.mxu0 0
    %313 = vmatmul.mubr.bf16.gmra.mxu0 %v218
    %v314 = vpop.f32.mrf.mxu0
    %v315 = vadd.f32 0.0, %v314
    %v316 = vpop.f32.mrf.mxu0
    %v317 = vpop.f32.mrf.mxu0
    %v318 = vadd.f32 0.0, %v317
    %v319 = vpop.f32.mrf.mxu0
    %320 = vdwg.mxu0
    %v321 = vmul.f32 %v120, %v259
    %v322 = vmul.f32 %v121, %v262
    %v323 = vmul.f32 %v122, %v267
    %v324 = vmul.f32 %v123, %v270
    %v325 = vmul.f32 %v124, %v275
    %v326 = vmul.f32 %v125, %v278
    %v327 = vmul.f32 %v126, %v283
    %v328 = vmul.f32 %v127, %v286
    %v329 = vmul.f32 %v128, %v291
    %v330 = vmul.f32 %v129, %v294
    %v331 = vmul.f32 %v130, %v299
    %v332 = vmul.f32 %v131, %v302
    %v333 = vmul.f32 %v132, %v307
    %v334 = vmul.f32 %v133, %v310
    %v335 = vmul.f32 %v134, %v315
    %v336 = vmul.f32 %v135, %v318
    %v337 = vpack.c.bf16 %v322, %v321
    %v338 = vpack.c.bf16 %v324, %v323
    %v339 = vpack.c.bf16 %v326, %v325
    %v340 = vpack.c.bf16 %v328, %v327
    %v341 = vpack.c.bf16 %v330, %v329
    %v342 = vpack.c.bf16 %v332, %v331
    %v343 = vpack.c.bf16 %v334, %v333
    %v344 = vpack.c.bf16 %v336, %v335
    %v361 = vunpack.c.l.b16 %v40
    %v362 = vunpack.c.l.b16 %v41
    %v363 = vunpack.c.l.b16 %v42
    %v364 = vunpack.c.l.b16 %v43
    %v365 = vunpack.c.l.b16 %v44
    %v366 = vunpack.c.l.b16 %v45
    %v367 = vunpack.c.l.b16 %v46
    %v368 = vunpack.c.l.b16 %v47
    %v369 = vunpack.c.l.b16 %v48
    %v370 = vunpack.c.l.b16 %v49
    %v371 = vunpack.c.l.b16 %v50
    %v372 = vunpack.c.l.b16 %v51
    %v373 = vunpack.c.l.b16 %v52
    %v374 = vunpack.c.l.b16 %v53
    %v375 = vunpack.c.l.b16 %v54
    %v376 = vunpack.c.l.b16 %v55
    %v377 = vpack.c.b16 %v362, %v361
    %v378 = vpack.c.b16 %v364, %v363
    %v379 = vpack.c.b16 %v366, %v365
    %v380 = vpack.c.b16 %v368, %v367
    %v381 = vpack.c.b16 %v370, %v369
    %v382 = vpack.c.b16 %v372, %v371
    %v383 = vpack.c.b16 %v374, %v373
    %v384 = vpack.c.b16 %v376, %v375
    %393 = vmatprep.subr.bf16.mxu0 0
    %394 = vmatpush1.bf16.msra.mxu0 %v344
    %395 = vmatprep.subr.bf16.mxu0 0
    %396 = vmatpush1.bf16.msra.mxu0 %v343
    %397 = vmatprep.subr.bf16.mxu0 0
    %398 = vmatpush1.bf16.msra.mxu0 %v342
    %399 = vmatprep.subr.bf16.mxu0 0
    %400 = vmatpush1.bf16.msra.mxu0 %v341
    %401 = vmatprep.subr.bf16.mxu0 0
    %402 = vmatpush1.bf16.msra.mxu0 %v340
    %403 = vmatprep.subr.bf16.mxu0 0
    %404 = vmatpush1.bf16.msra.mxu0 %v339
    %405 = vmatprep.subr.bf16.mxu0 0
    %406 = vmatpush1.bf16.msra.mxu0 %v338
    %407 = vmatprep.subr.bf16.mxu0 0
    %408 = vmatpush1.bf16.msra.mxu0 %v337
    %409 = vmatprep.subr.bf16.mxu0 0
    %410 = vmatpush2.bf16.msra.mxu0 0
    %411 = vmatprep.subr.bf16.mxu0 0
    %412 = vmatpush2.bf16.msra.mxu0 0
    %413 = vmatprep.subr.bf16.mxu0 0
    %414 = vmatpush2.bf16.msra.mxu0 0
    %415 = vmatprep.subr.bf16.mxu0 0
    %416 = vmatpush2.bf16.msra.mxu0 0
    %417 = vmatprep.subr.bf16.mxu0 0
    %418 = vmatpush2.bf16.msra.mxu0 0
    %419 = vmatprep.subr.bf16.mxu0 0
    %420 = vmatpush2.bf16.msra.mxu0 0
    %421 = vmatprep.subr.bf16.mxu0 0
    %422 = vmatpush2.bf16.msra.mxu0 0
    %423 = vmatprep.subr.bf16.mxu0 0
    %424 = vmatpush2.bf16.msra.mxu0 0
    %425 = vmatprep.mubr.bf16.mxu0 0
    %426 = vmatmul.mubr.bf16.gmra.mxu0 %v377
    %v427 = vpop.f32.mrf.mxu0
    %v428 = vadd.f32 %v321, %v427
    %v429 = vpop.f32.mrf.mxu0
    %v430 = vpop.f32.mrf.mxu0
    %v431 = vadd.f32 %v322, %v430
    %v432 = vpop.f32.mrf.mxu0
    %433 = vmatprep.mubr.bf16.mxu0 0
    %434 = vmatmul.mubr.bf16.gmra.mxu0 %v378
    %v435 = vpop.f32.mrf.mxu0
    %v436 = vadd.f32 %v323, %v435
    %v437 = vpop.f32.mrf.mxu0
    %v438 = vpop.f32.mrf.mxu0
    %v439 = vadd.f32 %v324, %v438
    %v440 = vpop.f32.mrf.mxu0
    %441 = vmatprep.mubr.bf16.mxu0 0
    %442 = vmatmul.mubr.bf16.gmra.mxu0 %v379
    %v443 = vpop.f32.mrf.mxu0
    %v444 = vadd.f32 %v325, %v443
    %v445 = vpop.f32.mrf.mxu0
    %v446 = vpop.f32.mrf.mxu0
    %v447 = vadd.f32 %v326, %v446
    %v448 = vpop.f32.mrf.mxu0
    %449 = vmatprep.mubr.bf16.mxu0 0
    %450 = vmatmul.mubr.bf16.gmra.mxu0 %v380
    %v451 = vpop.f32.mrf.mxu0
    %v452 = vadd.f32 %v327, %v451
    %v453 = vpop.f32.mrf.mxu0
    %v454 = vpop.f32.mrf.mxu0
    %v455 = vadd.f32 %v328, %v454
    %v456 = vpop.f32.mrf.mxu0
    %457 = vmatprep.mubr.bf16.mxu0 0
    %458 = vmatmul.mubr.bf16.gmra.mxu0 %v381
    %v459 = vpop.f32.mrf.mxu0
    %v460 = vadd.f32 %v329, %v459
    %v461 = vpop.f32.mrf.mxu0
    %v462 = vpop.f32.mrf.mxu0
    %v463 = vadd.f32 %v330, %v462
    %v464 = vpop.f32.mrf.mxu0
    %465 = vmatprep.mubr.bf16.mxu0 0
    %466 = vmatmul.mubr.bf16.gmra.mxu0 %v382
    %v467 = vpop.f32.mrf.mxu0
    %v468 = vadd.f32 %v331, %v467
    %v469 = vpop.f32.mrf.mxu0
    %v470 = vpop.f32.mrf.mxu0
    %v471 = vadd.f32 %v332, %v470
    %v472 = vpop.f32.mrf.mxu0
    %473 = vmatprep.mubr.bf16.mxu0 0
    %474 = vmatmul.mubr.bf16.gmra.mxu0 %v383
    %v475 = vpop.f32.mrf.mxu0
    %v476 = vadd.f32 %v333, %v475
    %v477 = vpop.f32.mrf.mxu0
    %v478 = vpop.f32.mrf.mxu0
    %v479 = vadd.f32 %v334, %v478
    %v480 = vpop.f32.mrf.mxu0
    %481 = vmatprep.mubr.bf16.mxu0 0
    %482 = vmatmul.mubr.bf16.gmra.mxu0 %v384
    %v483 = vpop.f32.mrf.mxu0
    %v484 = vadd.f32 %v335, %v483
    %v485 = vpop.f32.mrf.mxu0
    %v486 = vpop.f32.mrf.mxu0
    %v487 = vadd.f32 %v336, %v486
    %v488 = vpop.f32.mrf.mxu0
    %489 = vdwg.mxu0
    %v490 = vmul.f32 %v120, %v428
    %v491 = vmul.f32 %v121, %v431
    %v492 = vmul.f32 %v122, %v436
    %v493 = vmul.f32 %v123, %v439
    %v494 = vmul.f32 %v124, %v444
    %v495 = vmul.f32 %v125, %v447
    %v496 = vmul.f32 %v126, %v452
    %v497 = vmul.f32 %v127, %v455
    %v498 = vmul.f32 %v128, %v460
    %v499 = vmul.f32 %v129, %v463
    %v500 = vmul.f32 %v130, %v468
    %v501 = vmul.f32 %v131, %v471
    %v502 = vmul.f32 %v132, %v476
    %v503 = vmul.f32 %v133, %v479
    %v504 = vmul.f32 %v134, %v484
    %v505 = vmul.f32 %v135, %v487
    %v506 = vld [vmem:[%s3] sm:$0x1]
    %v508 = vlaneseq
    %v509 = vshrl.u32 %v508, 7
    %v510 = vsub.s32 0, %v509
    %v511 = vrot.slane %v506, %v510
    %v513 = vadd.f32 %v490, %v511
    %v514 = vadd.f32 %v491, %v511
    %v515 = vadd.f32 %v492, %v511
    %v516 = vadd.f32 %v493, %v511
    %v517 = vadd.f32 %v494, %v511
    %v518 = vadd.f32 %v495, %v511
    %v519 = vadd.f32 %v496, %v511
    %v520 = vadd.f32 %v497, %v511
    %v521 = vadd.f32 %v498, %v511
    %v522 = vadd.f32 %v499, %v511
    %v523 = vadd.f32 %v500, %v511
    %v524 = vadd.f32 %v501, %v511
    %v525 = vadd.f32 %v502, %v511
    %v526 = vadd.f32 %v503, %v511
    %v527 = vadd.f32 %v504, %v511
    %v528 = vadd.f32 %v505, %v511
    %vm529 = vcmask 261120
    %v530 = vsel %vm529, %v513, 0.0
    %v531 = vsel %vm529, %v514, 0.0
    %v532 = vadd.f32 %v530, %v531
    %v533 = vsel %vm529, %v515, 0.0
    %v534 = vadd.f32 %v532, %v533
    %v535 = vsel %vm529, %v516, 0.0
    %v536 = vadd.f32 %v534, %v535
    %v537 = vsel %vm529, %v517, 0.0
    %v538 = vadd.f32 %v536, %v537
    %v539 = vsel %vm529, %v518, 0.0
    %v540 = vadd.f32 %v538, %v539
    %v541 = vsel %vm529, %v519, 0.0
    %v542 = vadd.f32 %v540, %v541
    %v543 = vsel %vm529, %v520, 0.0
    %v544 = vadd.f32 %v542, %v543
    %v545 = vsel %vm529, %v521, 0.0
    %v546 = vadd.f32 %v544, %v545
    %v547 = vsel %vm529, %v522, 0.0
    %v548 = vadd.f32 %v546, %v547
    %v549 = vsel %vm529, %v523, 0.0
    %v550 = vadd.f32 %v548, %v549
    %v551 = vsel %vm529, %v524, 0.0
    %v552 = vadd.f32 %v550, %v551
    %v553 = vsel %vm529, %v525, 0.0
    %v554 = vadd.f32 %v552, %v553
    %v555 = vsel %vm529, %v526, 0.0
    %v556 = vadd.f32 %v554, %v555
    %v557 = vsel %vm529, %v527, 0.0
    %v558 = vadd.f32 %v556, %v557
    %v559 = vsel %vm529, %v528, 0.0
    %v560 = vadd.f32 %v558, %v559
    %v561 = vrot.slane %v560, 4
    %v562 = vadd.f32 %v560, %v561
    %v563 = vrot.slane %v562, 2
    %v564 = vadd.f32 %v562, %v563
    %v565 = vrot.slane %v564, 1
    %v566 = vadd.f32 %v564, %v565
    %v567 = vmul.f32 %v566, 0.0078125
    %v568 = vsub.f32 %v513, %v567
    %v569 = vsub.f32 %v514, %v567
    %v570 = vsub.f32 %v515, %v567
    %v571 = vsub.f32 %v516, %v567
    %v572 = vsub.f32 %v517, %v567
    %v573 = vsub.f32 %v518, %v567
    %v574 = vsub.f32 %v519, %v567
    %v575 = vsub.f32 %v520, %v567
    %v576 = vsub.f32 %v521, %v567
    %v577 = vsub.f32 %v522, %v567
    %v578 = vsub.f32 %v523, %v567
    %v579 = vsub.f32 %v524, %v567
    %v580 = vsub.f32 %v525, %v567
    %v581 = vsub.f32 %v526, %v567
    %v582 = vsub.f32 %v527, %v567
    %v583 = vsub.f32 %v528, %v567
    %v584 = vmul.f32 %v568, %v568
    %v585 = vmul.f32 %v569, %v569
    %v586 = vmul.f32 %v570, %v570
    %v587 = vmul.f32 %v571, %v571
    %v588 = vmul.f32 %v572, %v572
    %v589 = vmul.f32 %v573, %v573
    %v590 = vmul.f32 %v574, %v574
    %v591 = vmul.f32 %v575, %v575
    %v592 = vmul.f32 %v576, %v576
    %v593 = vmul.f32 %v577, %v577
    %v594 = vmul.f32 %v578, %v578
    %v595 = vmul.f32 %v579, %v579
    %v596 = vmul.f32 %v580, %v580
    %v597 = vmul.f32 %v581, %v581
    %v598 = vmul.f32 %v582, %v582
    %v599 = vmul.f32 %v583, %v583
    %v600 = vsel %vm529, %v584, 0.0
    %v601 = vsel %vm529, %v585, 0.0
    %v602 = vadd.f32 %v600, %v601
    %v603 = vsel %vm529, %v586, 0.0
    %v604 = vadd.f32 %v602, %v603
    %v605 = vsel %vm529, %v587, 0.0
    %v606 = vadd.f32 %v604, %v605
    %v607 = vsel %vm529, %v588, 0.0
    %v608 = vadd.f32 %v606, %v607
    %v609 = vsel %vm529, %v589, 0.0
    %v610 = vadd.f32 %v608, %v609
    %v611 = vsel %vm529, %v590, 0.0
    %v612 = vadd.f32 %v610, %v611
    %v613 = vsel %vm529, %v591, 0.0
    %v614 = vadd.f32 %v612, %v613
    %v615 = vsel %vm529, %v592, 0.0
    %v616 = vadd.f32 %v614, %v615
    %v617 = vsel %vm529, %v593, 0.0
    %v618 = vadd.f32 %v616, %v617
    %v619 = vsel %vm529, %v594, 0.0
    %v620 = vadd.f32 %v618, %v619
    %v621 = vsel %vm529, %v595, 0.0
    %v622 = vadd.f32 %v620, %v621
    %v623 = vsel %vm529, %v596, 0.0
    %v624 = vadd.f32 %v622, %v623
    %v625 = vsel %vm529, %v597, 0.0
    %v626 = vadd.f32 %v624, %v625
    %v627 = vsel %vm529, %v598, 0.0
    %v628 = vadd.f32 %v626, %v627
    %v629 = vsel %vm529, %v599, 0.0
    %v630 = vadd.f32 %v628, %v629
    %v631 = vrot.slane %v630, 4
    %v632 = vadd.f32 %v630, %v631
    %v633 = vrot.slane %v632, 2
    %v634 = vadd.f32 %v632, %v633
    %v635 = vrot.slane %v634, 1
    %v636 = vadd.f32 %v634, %v635
    %v637 = vmul.f32 %v636, 0.0078125
    %v638 = vadd.f32 %v637, 1e-05
    %v639 = vrsqrt.pop %v638
    %v640 = vmul.f32 %v568, %v639
    %v641 = vmul.f32 %v569, %v639
    %v642 = vmul.f32 %v570, %v639
    %v643 = vmul.f32 %v571, %v639
    %v644 = vmul.f32 %v572, %v639
    %v645 = vmul.f32 %v573, %v639
    %v646 = vmul.f32 %v574, %v639
    %v647 = vmul.f32 %v575, %v639
    %v648 = vmul.f32 %v576, %v639
    %v649 = vmul.f32 %v577, %v639
    %v650 = vmul.f32 %v578, %v639
    %v651 = vmul.f32 %v579, %v639
    %v652 = vmul.f32 %v580, %v639
    %v653 = vmul.f32 %v581, %v639
    %v654 = vmul.f32 %v582, %v639
    %v655 = vmul.f32 %v583, %v639
    %v657 = vlaneseq
    %v658 = vshrl.u32 %v657, 7
    %v659 = vsub.s32 0, %v658
    %v660 = vrot.slane %v136, %v659
    %v662 = vmul.f32 %v640, %v660
    %v663 = vmul.f32 %v641, %v660
    %v664 = vmul.f32 %v642, %v660
    %v665 = vmul.f32 %v643, %v660
    %v666 = vmul.f32 %v644, %v660
    %v667 = vmul.f32 %v645, %v660
    %v668 = vmul.f32 %v646, %v660
    %v669 = vmul.f32 %v647, %v660
    %v670 = vmul.f32 %v648, %v660
    %v671 = vmul.f32 %v649, %v660
    %v672 = vmul.f32 %v650, %v660
    %v673 = vmul.f32 %v651, %v660
    %v674 = vmul.f32 %v652, %v660
    %v675 = vmul.f32 %v653, %v660
    %v676 = vmul.f32 %v654, %v660
    %v677 = vmul.f32 %v655, %v660
    %v679 = vlaneseq
    %v680 = vshrl.u32 %v679, 7
    %v681 = vsub.s32 0, %v680
    %v682 = vrot.slane %v137, %v681
    %v684 = vadd.f32 %v662, %v682
    %v685 = vadd.f32 %v663, %v682
    %v686 = vadd.f32 %v664, %v682
    %v687 = vadd.f32 %v665, %v682
    %v688 = vadd.f32 %v666, %v682
    %v689 = vadd.f32 %v667, %v682
    %v690 = vadd.f32 %v668, %v682
    %v691 = vadd.f32 %v669, %v682
    %v692 = vadd.f32 %v670, %v682
    %v693 = vadd.f32 %v671, %v682
    %v694 = vadd.f32 %v672, %v682
    %v695 = vadd.f32 %v673, %v682
    %v696 = vadd.f32 %v674, %v682
    %v697 = vadd.f32 %v675, %v682
    %v698 = vadd.f32 %v676, %v682
    %v699 = vadd.f32 %v677, %v682
    %v700 = vmax.f32 %v684, 0.0
    %v701 = vmax.f32 %v685, 0.0
    %v702 = vmax.f32 %v686, 0.0
    %v703 = vmax.f32 %v687, 0.0
    %v704 = vmax.f32 %v688, 0.0
    %v705 = vmax.f32 %v689, 0.0
    %v706 = vmax.f32 %v690, 0.0
    %v707 = vmax.f32 %v691, 0.0
    %v708 = vmax.f32 %v692, 0.0
    %v709 = vmax.f32 %v693, 0.0
    %v710 = vmax.f32 %v694, 0.0
    %v711 = vmax.f32 %v695, 0.0
    %v712 = vmax.f32 %v696, 0.0
    %v713 = vmax.f32 %v697, 0.0
    %v714 = vmax.f32 %v698, 0.0
    %v715 = vmax.f32 %v699, 0.0
    %v716 = vpack.c.bf16 %v701, %v700
    %v717 = vpack.c.bf16 %v703, %v702
    %v718 = vpack.c.bf16 %v705, %v704
    %v719 = vpack.c.bf16 %v707, %v706
    %v720 = vpack.c.bf16 %v709, %v708
    %v721 = vpack.c.bf16 %v711, %v710
    %v722 = vpack.c.bf16 %v713, %v712
    %v723 = vpack.c.bf16 %v715, %v714
    %v724 = vld [vmem:[%s4] sm:$0xf]
    %v725 = vld [vmem:[%s4 + $0x4] sm:$0xf]
    %v726 = vld [vmem:[%s4 + $0x8] sm:$0xf]
    %v727 = vld [vmem:[%s4 + $0xc] sm:$0xf]
    %v732 = vunpack.c.l.b16 %v724
    %v733 = vunpack.c.l.b16 %v725
    %v734 = vunpack.c.l.b16 %v726
    %v735 = vunpack.c.l.b16 %v727
    %v736 = vpack.c.b16 %v733, %v732
    %v737 = vpack.c.b16 %v735, %v734
    %v741 = vsel %vm529, %v716, 0
    %v744 = vsel %vm529, %v717, 0
    %v747 = vsel %vm529, %v718, 0
    %v750 = vsel %vm529, %v719, 0
    %v753 = vsel %vm529, %v720, 0
    %v756 = vsel %vm529, %v721, 0
    %v759 = vsel %vm529, %v722, 0
    %v762 = vsel %vm529, %v723, 0
    %764 = vmatprep.subr.bf16.mxu0 0
    %765 = vmatpush1.bf16.msra.mxu0 0
    %766 = vmatprep.subr.bf16.mxu0 0
    %767 = vmatpush1.bf16.msra.mxu0 0
    %768 = vmatprep.subr.bf16.mxu0 0
    %769 = vmatpush1.bf16.msra.mxu0 0
    %770 = vmatprep.subr.bf16.mxu0 0
    %771 = vmatpush1.bf16.msra.mxu0 0
    %772 = vmatprep.subr.bf16.mxu0 0
    %773 = vmatpush1.bf16.msra.mxu0 0
    %774 = vmatprep.subr.bf16.mxu0 0
    %775 = vmatpush1.bf16.msra.mxu0 0
    %776 = vmatprep.subr.bf16.mxu0 0
    %777 = vmatpush1.bf16.msra.mxu0 %v737
    %778 = vmatprep.subr.bf16.mxu0 0
    %779 = vmatpush1.bf16.msra.mxu0 %v736
    %780 = vmatprep.subr.bf16.mxu0 0
    %781 = vmatpush2.bf16.msra.mxu0 0
    %782 = vmatprep.subr.bf16.mxu0 0
    %783 = vmatpush2.bf16.msra.mxu0 0
    %784 = vmatprep.subr.bf16.mxu0 0
    %785 = vmatpush2.bf16.msra.mxu0 0
    %786 = vmatprep.subr.bf16.mxu0 0
    %787 = vmatpush2.bf16.msra.mxu0 0
    %788 = vmatprep.subr.bf16.mxu0 0
    %789 = vmatpush2.bf16.msra.mxu0 0
    %790 = vmatprep.subr.bf16.mxu0 0
    %791 = vmatpush2.bf16.msra.mxu0 0
    %792 = vmatprep.subr.bf16.mxu0 0
    %793 = vmatpush2.bf16.msra.mxu0 0
    %794 = vmatprep.subr.bf16.mxu0 0
    %795 = vmatpush2.bf16.msra.mxu0 0
    %796 = vmatprep.mubr.bf16.mxu0 0
    %797 = vmatmul.mubr.bf16.gmra.mxu0 %v741
    %v798 = vpop.f32.mrf.mxu0
    %v799 = vadd.f32 0.0, %v798
    %v800 = vpop.f32.mrf.mxu0
    %v801 = vpop.f32.mrf.mxu0
    %v802 = vadd.f32 0.0, %v801
    %v803 = vpop.f32.mrf.mxu0
    %804 = vmatprep.mubr.bf16.mxu0 0
    %805 = vmatmul.mubr.bf16.gmra.mxu0 %v744
    %v806 = vpop.f32.mrf.mxu0
    %v807 = vadd.f32 0.0, %v806
    %v808 = vpop.f32.mrf.mxu0
    %v809 = vpop.f32.mrf.mxu0
    %v810 = vadd.f32 0.0, %v809
    %v811 = vpop.f32.mrf.mxu0
    %812 = vmatprep.mubr.bf16.mxu0 0
    %813 = vmatmul.mubr.bf16.gmra.mxu0 %v747
    %v814 = vpop.f32.mrf.mxu0
    %v815 = vadd.f32 0.0, %v814
    %v816 = vpop.f32.mrf.mxu0
    %v817 = vpop.f32.mrf.mxu0
    %v818 = vadd.f32 0.0, %v817
    %v819 = vpop.f32.mrf.mxu0
    %820 = vmatprep.mubr.bf16.mxu0 0
    %821 = vmatmul.mubr.bf16.gmra.mxu0 %v750
    %v822 = vpop.f32.mrf.mxu0
    %v823 = vadd.f32 0.0, %v822
    %v824 = vpop.f32.mrf.mxu0
    %v825 = vpop.f32.mrf.mxu0
    %v826 = vadd.f32 0.0, %v825
    %v827 = vpop.f32.mrf.mxu0
    %828 = vmatprep.mubr.bf16.mxu0 0
    %829 = vmatmul.mubr.bf16.gmra.mxu0 %v753
    %v830 = vpop.f32.mrf.mxu0
    %v831 = vadd.f32 0.0, %v830
    %v832 = vpop.f32.mrf.mxu0
    %v833 = vpop.f32.mrf.mxu0
    %v834 = vadd.f32 0.0, %v833
    %v835 = vpop.f32.mrf.mxu0
    %836 = vmatprep.mubr.bf16.mxu0 0
    %837 = vmatmul.mubr.bf16.gmra.mxu0 %v756
    %v838 = vpop.f32.mrf.mxu0
    %v839 = vadd.f32 0.0, %v838
    %v840 = vpop.f32.mrf.mxu0
    %v841 = vpop.f32.mrf.mxu0
    %v842 = vadd.f32 0.0, %v841
    %v843 = vpop.f32.mrf.mxu0
    %844 = vmatprep.mubr.bf16.mxu0 0
    %845 = vmatmul.mubr.bf16.gmra.mxu0 %v759
    %v846 = vpop.f32.mrf.mxu0
    %v847 = vadd.f32 0.0, %v846
    %v848 = vpop.f32.mrf.mxu0
    %v849 = vpop.f32.mrf.mxu0
    %v850 = vadd.f32 0.0, %v849
    %v851 = vpop.f32.mrf.mxu0
    %852 = vmatprep.mubr.bf16.mxu0 0
    %853 = vmatmul.mubr.bf16.gmra.mxu0 %v762
    %v854 = vpop.f32.mrf.mxu0
    %v855 = vadd.f32 0.0, %v854
    %v856 = vpop.f32.mrf.mxu0
    %v857 = vpop.f32.mrf.mxu0
    %v858 = vadd.f32 0.0, %v857
    %v859 = vpop.f32.mrf.mxu0
    %860 = vdwg.mxu0
    %v861 = vmul.f32 %v120, %v799
    %v862 = vmul.f32 %v121, %v802
    %v863 = vmul.f32 %v122, %v807
    %v864 = vmul.f32 %v123, %v810
    %v865 = vmul.f32 %v124, %v815
    %v866 = vmul.f32 %v125, %v818
    %v867 = vmul.f32 %v126, %v823
    %v868 = vmul.f32 %v127, %v826
    %v869 = vmul.f32 %v128, %v831
    %v870 = vmul.f32 %v129, %v834
    %v871 = vmul.f32 %v130, %v839
    %v872 = vmul.f32 %v131, %v842
    %v873 = vmul.f32 %v132, %v847
    %v874 = vmul.f32 %v133, %v850
    %v875 = vmul.f32 %v134, %v855
    %v876 = vmul.f32 %v135, %v858
    %v877 = vpack.c.bf16 %v862, %v861
    %v878 = vpack.c.bf16 %v864, %v863
    %v879 = vpack.c.bf16 %v866, %v865
    %v880 = vpack.c.bf16 %v868, %v867
    %v881 = vpack.c.bf16 %v870, %v869
    %v882 = vpack.c.bf16 %v872, %v871
    %v883 = vpack.c.bf16 %v874, %v873
    %v884 = vpack.c.bf16 %v876, %v875
    %885 = vmatprep.subr.bf16.mxu0 0
    %886 = vmatpush1.bf16.msra.mxu0 %v884
    %887 = vmatprep.subr.bf16.mxu0 0
    %888 = vmatpush1.bf16.msra.mxu0 %v883
    %889 = vmatprep.subr.bf16.mxu0 0
    %890 = vmatpush1.bf16.msra.mxu0 %v882
    %891 = vmatprep.subr.bf16.mxu0 0
    %892 = vmatpush1.bf16.msra.mxu0 %v881
    %893 = vmatprep.subr.bf16.mxu0 0
    %894 = vmatpush1.bf16.msra.mxu0 %v880
    %895 = vmatprep.subr.bf16.mxu0 0
    %896 = vmatpush1.bf16.msra.mxu0 %v879
    %897 = vmatprep.subr.bf16.mxu0 0
    %898 = vmatpush1.bf16.msra.mxu0 %v878
    %899 = vmatprep.subr.bf16.mxu0 0
    %900 = vmatpush1.bf16.msra.mxu0 %v877
    %901 = vmatprep.subr.bf16.mxu0 0
    %902 = vmatpush2.bf16.msra.mxu0 0
    %903 = vmatprep.subr.bf16.mxu0 0
    %904 = vmatpush2.bf16.msra.mxu0 0
    %905 = vmatprep.subr.bf16.mxu0 0
    %906 = vmatpush2.bf16.msra.mxu0 0
    %907 = vmatprep.subr.bf16.mxu0 0
    %908 = vmatpush2.bf16.msra.mxu0 0
    %909 = vmatprep.subr.bf16.mxu0 0
    %910 = vmatpush2.bf16.msra.mxu0 0
    %911 = vmatprep.subr.bf16.mxu0 0
    %912 = vmatpush2.bf16.msra.mxu0 0
    %913 = vmatprep.subr.bf16.mxu0 0
    %914 = vmatpush2.bf16.msra.mxu0 0
    %915 = vmatprep.subr.bf16.mxu0 0
    %916 = vmatpush2.bf16.msra.mxu0 0
    %917 = vmatprep.mubr.bf16.mxu0 0
    %918 = vmatmul.mubr.bf16.gmra.mxu0 %v377
    %v919 = vpop.f32.mrf.mxu0
    %v920 = vadd.f32 %v861, %v919
    %v921 = vpop.f32.mrf.mxu0
    %v922 = vpop.f32.mrf.mxu0
    %v923 = vadd.f32 %v862, %v922
    %v924 = vpop.f32.mrf.mxu0
    %925 = vmatprep.mubr.bf16.mxu0 0
    %926 = vmatmul.mubr.bf16.gmra.mxu0 %v378
    %v927 = vpop.f32.mrf.mxu0
    %v928 = vadd.f32 %v863, %v927
    %v929 = vpop.f32.mrf.mxu0
    %v930 = vpop.f32.mrf.mxu0
    %v931 = vadd.f32 %v864, %v930
    %v932 = vpop.f32.mrf.mxu0
    %933 = vmatprep.mubr.bf16.mxu0 0
    %934 = vmatmul.mubr.bf16.gmra.mxu0 %v379
    %v935 = vpop.f32.mrf.mxu0
    %v936 = vadd.f32 %v865, %v935
    %v937 = vpop.f32.mrf.mxu0
    %v938 = vpop.f32.mrf.mxu0
    %v939 = vadd.f32 %v866, %v938
    %v940 = vpop.f32.mrf.mxu0
    %941 = vmatprep.mubr.bf16.mxu0 0
    %942 = vmatmul.mubr.bf16.gmra.mxu0 %v380
    %v943 = vpop.f32.mrf.mxu0
    %v944 = vadd.f32 %v867, %v943
    %v945 = vpop.f32.mrf.mxu0
    %v946 = vpop.f32.mrf.mxu0
    %v947 = vadd.f32 %v868, %v946
    %v948 = vpop.f32.mrf.mxu0
    %949 = vmatprep.mubr.bf16.mxu0 0
    %950 = vmatmul.mubr.bf16.gmra.mxu0 %v381
    %v951 = vpop.f32.mrf.mxu0
    %v952 = vadd.f32 %v869, %v951
    %v953 = vpop.f32.mrf.mxu0
    %v954 = vpop.f32.mrf.mxu0
    %v955 = vadd.f32 %v870, %v954
    %v956 = vpop.f32.mrf.mxu0
    %957 = vmatprep.mubr.bf16.mxu0 0
    %958 = vmatmul.mubr.bf16.gmra.mxu0 %v382
    %v959 = vpop.f32.mrf.mxu0
    %v960 = vadd.f32 %v871, %v959
    %v961 = vpop.f32.mrf.mxu0
    %v962 = vpop.f32.mrf.mxu0
    %v963 = vadd.f32 %v872, %v962
    %v964 = vpop.f32.mrf.mxu0
    %965 = vmatprep.mubr.bf16.mxu0 0
    %966 = vmatmul.mubr.bf16.gmra.mxu0 %v383
    %v967 = vpop.f32.mrf.mxu0
    %v968 = vadd.f32 %v873, %v967
    %v969 = vpop.f32.mrf.mxu0
    %v970 = vpop.f32.mrf.mxu0
    %v971 = vadd.f32 %v874, %v970
    %v972 = vpop.f32.mrf.mxu0
    %973 = vmatprep.mubr.bf16.mxu0 0
    %974 = vmatmul.mubr.bf16.gmra.mxu0 %v384
    %v975 = vpop.f32.mrf.mxu0
    %v976 = vadd.f32 %v875, %v975
    %v977 = vpop.f32.mrf.mxu0
    %v978 = vpop.f32.mrf.mxu0
    %v979 = vadd.f32 %v876, %v978
    %v980 = vpop.f32.mrf.mxu0
    %981 = vdwg.mxu0
    %v982 = vmul.f32 %v120, %v920
    %v983 = vmul.f32 %v121, %v923
    %v984 = vmul.f32 %v122, %v928
    %v985 = vmul.f32 %v123, %v931
    %v986 = vmul.f32 %v124, %v936
    %v987 = vmul.f32 %v125, %v939
    %v988 = vmul.f32 %v126, %v944
    %v989 = vmul.f32 %v127, %v947
    %v990 = vmul.f32 %v128, %v952
    %v991 = vmul.f32 %v129, %v955
    %v992 = vmul.f32 %v130, %v960
    %v993 = vmul.f32 %v131, %v963
    %v994 = vmul.f32 %v132, %v968
    %v995 = vmul.f32 %v133, %v971
    %v996 = vmul.f32 %v134, %v976
    %v997 = vmul.f32 %v135, %v979
    %v998 = vld [vmem:[%s5] sm:$0x1]
    %v1000 = vlaneseq
    %v1001 = vshrl.u32 %v1000, 7
    %v1002 = vsub.s32 0, %v1001
    %v1003 = vrot.slane %v998, %v1002
    %v1005 = vadd.f32 %v982, %v1003
    %v1006 = vadd.f32 %v983, %v1003
    %v1007 = vadd.f32 %v984, %v1003
    %v1008 = vadd.f32 %v985, %v1003
    %v1009 = vadd.f32 %v986, %v1003
    %v1010 = vadd.f32 %v987, %v1003
    %v1011 = vadd.f32 %v988, %v1003
    %v1012 = vadd.f32 %v989, %v1003
    %v1013 = vadd.f32 %v990, %v1003
    %v1014 = vadd.f32 %v991, %v1003
    %v1015 = vadd.f32 %v992, %v1003
    %v1016 = vadd.f32 %v993, %v1003
    %v1017 = vadd.f32 %v994, %v1003
    %v1018 = vadd.f32 %v995, %v1003
    %v1019 = vadd.f32 %v996, %v1003
    %v1020 = vadd.f32 %v997, %v1003
    %v1021 = vsel %vm529, %v1005, 0.0
    %v1022 = vsel %vm529, %v1006, 0.0
    %v1023 = vadd.f32 %v1021, %v1022
    %v1024 = vsel %vm529, %v1007, 0.0
    %v1025 = vadd.f32 %v1023, %v1024
    %v1026 = vsel %vm529, %v1008, 0.0
    %v1027 = vadd.f32 %v1025, %v1026
    %v1028 = vsel %vm529, %v1009, 0.0
    %v1029 = vadd.f32 %v1027, %v1028
    %v1030 = vsel %vm529, %v1010, 0.0
    %v1031 = vadd.f32 %v1029, %v1030
    %v1032 = vsel %vm529, %v1011, 0.0
    %v1033 = vadd.f32 %v1031, %v1032
    %v1034 = vsel %vm529, %v1012, 0.0
    %v1035 = vadd.f32 %v1033, %v1034
    %v1036 = vsel %vm529, %v1013, 0.0
    %v1037 = vadd.f32 %v1035, %v1036
    %v1038 = vsel %vm529, %v1014, 0.0
    %v1039 = vadd.f32 %v1037, %v1038
    %v1040 = vsel %vm529, %v1015, 0.0
    %v1041 = vadd.f32 %v1039, %v1040
    %v1042 = vsel %vm529, %v1016, 0.0
    %v1043 = vadd.f32 %v1041, %v1042
    %v1044 = vsel %vm529, %v1017, 0.0
    %v1045 = vadd.f32 %v1043, %v1044
    %v1046 = vsel %vm529, %v1018, 0.0
    %v1047 = vadd.f32 %v1045, %v1046
    %v1048 = vsel %vm529, %v1019, 0.0
    %v1049 = vadd.f32 %v1047, %v1048
    %v1050 = vsel %vm529, %v1020, 0.0
    %v1051 = vadd.f32 %v1049, %v1050
    %v1052 = vrot.slane %v1051, 4
    %v1053 = vadd.f32 %v1051, %v1052
    %v1054 = vrot.slane %v1053, 2
    %v1055 = vadd.f32 %v1053, %v1054
    %v1056 = vrot.slane %v1055, 1
    %v1057 = vadd.f32 %v1055, %v1056
    %v1058 = vmul.f32 %v1057, 0.0078125
    %v1059 = vsub.f32 %v1005, %v1058
    %v1060 = vsub.f32 %v1006, %v1058
    %v1061 = vsub.f32 %v1007, %v1058
    %v1062 = vsub.f32 %v1008, %v1058
    %v1063 = vsub.f32 %v1009, %v1058
    %v1064 = vsub.f32 %v1010, %v1058
    %v1065 = vsub.f32 %v1011, %v1058
    %v1066 = vsub.f32 %v1012, %v1058
    %v1067 = vsub.f32 %v1013, %v1058
    %v1068 = vsub.f32 %v1014, %v1058
    %v1069 = vsub.f32 %v1015, %v1058
    %v1070 = vsub.f32 %v1016, %v1058
    %v1071 = vsub.f32 %v1017, %v1058
    %v1072 = vsub.f32 %v1018, %v1058
    %v1073 = vsub.f32 %v1019, %v1058
    %v1074 = vsub.f32 %v1020, %v1058
    %v1075 = vmul.f32 %v1059, %v1059
    %v1076 = vmul.f32 %v1060, %v1060
    %v1077 = vmul.f32 %v1061, %v1061
    %v1078 = vmul.f32 %v1062, %v1062
    %v1079 = vmul.f32 %v1063, %v1063
    %v1080 = vmul.f32 %v1064, %v1064
    %v1081 = vmul.f32 %v1065, %v1065
    %v1082 = vmul.f32 %v1066, %v1066
    %v1083 = vmul.f32 %v1067, %v1067
    %v1084 = vmul.f32 %v1068, %v1068
    %v1085 = vmul.f32 %v1069, %v1069
    %v1086 = vmul.f32 %v1070, %v1070
    %v1087 = vmul.f32 %v1071, %v1071
    %v1088 = vmul.f32 %v1072, %v1072
    %v1089 = vmul.f32 %v1073, %v1073
    %v1090 = vmul.f32 %v1074, %v1074
    %v1091 = vsel %vm529, %v1075, 0.0
    %v1092 = vsel %vm529, %v1076, 0.0
    %v1093 = vadd.f32 %v1091, %v1092
    %v1094 = vsel %vm529, %v1077, 0.0
    %v1095 = vadd.f32 %v1093, %v1094
    %v1096 = vsel %vm529, %v1078, 0.0
    %v1097 = vadd.f32 %v1095, %v1096
    %v1098 = vsel %vm529, %v1079, 0.0
    %v1099 = vadd.f32 %v1097, %v1098
    %v1100 = vsel %vm529, %v1080, 0.0
    %v1101 = vadd.f32 %v1099, %v1100
    %v1102 = vsel %vm529, %v1081, 0.0
    %v1103 = vadd.f32 %v1101, %v1102
    %v1104 = vsel %vm529, %v1082, 0.0
    %v1105 = vadd.f32 %v1103, %v1104
    %v1106 = vsel %vm529, %v1083, 0.0
    %v1107 = vadd.f32 %v1105, %v1106
    %v1108 = vsel %vm529, %v1084, 0.0
    %v1109 = vadd.f32 %v1107, %v1108
    %v1110 = vsel %vm529, %v1085, 0.0
    %v1111 = vadd.f32 %v1109, %v1110
    %v1112 = vsel %vm529, %v1086, 0.0
    %v1113 = vadd.f32 %v1111, %v1112
    %v1114 = vsel %vm529, %v1087, 0.0
    %v1115 = vadd.f32 %v1113, %v1114
    %v1116 = vsel %vm529, %v1088, 0.0
    %v1117 = vadd.f32 %v1115, %v1116
    %v1118 = vsel %vm529, %v1089, 0.0
    %v1119 = vadd.f32 %v1117, %v1118
    %v1120 = vsel %vm529, %v1090, 0.0
    %v1121 = vadd.f32 %v1119, %v1120
    %v1122 = vrot.slane %v1121, 4
    %v1123 = vadd.f32 %v1121, %v1122
    %v1124 = vrot.slane %v1123, 2
    %v1125 = vadd.f32 %v1123, %v1124
    %v1126 = vrot.slane %v1125, 1
    %v1127 = vadd.f32 %v1125, %v1126
    %v1128 = vmul.f32 %v1127, 0.0078125
    %v1129 = vadd.f32 %v1128, 1e-05
    %v1130 = vrsqrt.pop %v1129
    %v1131 = vmul.f32 %v1059, %v1130
    %v1132 = vmul.f32 %v1060, %v1130
    %v1133 = vmul.f32 %v1061, %v1130
    %v1134 = vmul.f32 %v1062, %v1130
    %v1135 = vmul.f32 %v1063, %v1130
    %v1136 = vmul.f32 %v1064, %v1130
    %v1137 = vmul.f32 %v1065, %v1130
    %v1138 = vmul.f32 %v1066, %v1130
    %v1139 = vmul.f32 %v1067, %v1130
    %v1140 = vmul.f32 %v1068, %v1130
    %v1141 = vmul.f32 %v1069, %v1130
    %v1142 = vmul.f32 %v1070, %v1130
    %v1143 = vmul.f32 %v1071, %v1130
    %v1144 = vmul.f32 %v1072, %v1130
    %v1145 = vmul.f32 %v1073, %v1130
    %v1146 = vmul.f32 %v1074, %v1130
    %v1147 = vmul.f32 %v1131, %v660
    %v1148 = vmul.f32 %v1132, %v660
    %v1149 = vmul.f32 %v1133, %v660
    %v1150 = vmul.f32 %v1134, %v660
    %v1151 = vmul.f32 %v1135, %v660
    %v1152 = vmul.f32 %v1136, %v660
    %v1153 = vmul.f32 %v1137, %v660
    %v1154 = vmul.f32 %v1138, %v660
    %v1155 = vmul.f32 %v1139, %v660
    %v1156 = vmul.f32 %v1140, %v660
    %v1157 = vmul.f32 %v1141, %v660
    %v1158 = vmul.f32 %v1142, %v660
    %v1159 = vmul.f32 %v1143, %v660
    %v1160 = vmul.f32 %v1144, %v660
    %v1161 = vmul.f32 %v1145, %v660
    %v1162 = vmul.f32 %v1146, %v660
    %v1163 = vadd.f32 %v1147, %v682
    %v1164 = vadd.f32 %v1148, %v682
    %v1165 = vadd.f32 %v1149, %v682
    %v1166 = vadd.f32 %v1150, %v682
    %v1167 = vadd.f32 %v1151, %v682
    %v1168 = vadd.f32 %v1152, %v682
    %v1169 = vadd.f32 %v1153, %v682
    %v1170 = vadd.f32 %v1154, %v682
    %v1171 = vadd.f32 %v1155, %v682
    %v1172 = vadd.f32 %v1156, %v682
    %v1173 = vadd.f32 %v1157, %v682
    %v1174 = vadd.f32 %v1158, %v682
    %v1175 = vadd.f32 %v1159, %v682
    %v1176 = vadd.f32 %v1160, %v682
    %v1177 = vadd.f32 %v1161, %v682
    %v1178 = vadd.f32 %v1162, %v682
    %v1179 = vmax.f32 %v1163, 0.0
    %v1180 = vmax.f32 %v1164, 0.0
    %v1181 = vmax.f32 %v1165, 0.0
    %v1182 = vmax.f32 %v1166, 0.0
    %v1183 = vmax.f32 %v1167, 0.0
    %v1184 = vmax.f32 %v1168, 0.0
    %v1185 = vmax.f32 %v1169, 0.0
    %v1186 = vmax.f32 %v1170, 0.0
    %v1187 = vmax.f32 %v1171, 0.0
    %v1188 = vmax.f32 %v1172, 0.0
    %v1189 = vmax.f32 %v1173, 0.0
    %v1190 = vmax.f32 %v1174, 0.0
    %v1191 = vmax.f32 %v1175, 0.0
    %v1192 = vmax.f32 %v1176, 0.0
    %v1193 = vmax.f32 %v1177, 0.0
    %v1194 = vmax.f32 %v1178, 0.0
    %v1195 = vlaneseq
    %v1196 = vshrl.u32 %v1195, 7
    %v1197 = vld [vmem:[%s8] sm:$0x1]
    %v1198 = vlaneseq
    %v1199 = vshrl.u32 %v1198, 7
    %v1200 = vsub.s32 0, %v1199
    %v1201 = vrot.slane %v1197, %v1200
    %vm1202 = vcmp.eq.s32.totalorder %v1196, %v1201
    %v1203 = vsel %vm1202, 1, 0
    %v1204 = vcvt.s32.f32 %v1203
    %1205 = vadd.xlane.f32.xlu0 %v1204
    %v1206 = vpop.xlane.xlu0 %1205
    %v1207 = vpack.c.bf16 %v1204, %v1204
    %v1208 = vpack.c.bf16 %v1180, %v1179
    %v1209 = vpack.c.bf16 %v1182, %v1181
    %v1210 = vpack.c.bf16 %v1184, %v1183
    %v1211 = vpack.c.bf16 %v1186, %v1185
    %v1212 = vpack.c.bf16 %v1188, %v1187
    %v1213 = vpack.c.bf16 %v1190, %v1189
    %v1214 = vpack.c.bf16 %v1192, %v1191
    %v1215 = vpack.c.bf16 %v1194, %v1193
    %1216 = vmatprep.subr.bf16.mxu0 0
    %1217 = vmatpush1.bf16.msra.mxu0 %v1215
    %1218 = vmatprep.subr.bf16.mxu0 0
    %1219 = vmatpush1.bf16.msra.mxu0 %v1214
    %1220 = vmatprep.subr.bf16.mxu0 0
    %1221 = vmatpush1.bf16.msra.mxu0 %v1213
    %1222 = vmatprep.subr.bf16.mxu0 0
    %1223 = vmatpush1.bf16.msra.mxu0 %v1212
    %1224 = vmatprep.subr.bf16.mxu0 0
    %1225 = vmatpush1.bf16.msra.mxu0 %v1211
    %1226 = vmatprep.subr.bf16.mxu0 0
    %1227 = vmatpush1.bf16.msra.mxu0 %v1210
    %1228 = vmatprep.subr.bf16.mxu0 0
    %1229 = vmatpush1.bf16.msra.mxu0 %v1209
    %1230 = vmatprep.subr.bf16.mxu0 0
    %1231 = vmatpush1.bf16.msra.mxu0 %v1208
    %1232 = vmatprep.subr.bf16.mxu0 0
    %1233 = vmatpush2.bf16.msra.mxu0 0
    %1234 = vmatprep.subr.bf16.mxu0 0
    %1235 = vmatpush2.bf16.msra.mxu0 0
    %1236 = vmatprep.subr.bf16.mxu0 0
    %1237 = vmatpush2.bf16.msra.mxu0 0
    %1238 = vmatprep.subr.bf16.mxu0 0
    %1239 = vmatpush2.bf16.msra.mxu0 0
    %1240 = vmatprep.subr.bf16.mxu0 0
    %1241 = vmatpush2.bf16.msra.mxu0 0
    %1242 = vmatprep.subr.bf16.mxu0 0
    %1243 = vmatpush2.bf16.msra.mxu0 0
    %1244 = vmatprep.subr.bf16.mxu0 0
    %1245 = vmatpush2.bf16.msra.mxu0 0
    %1246 = vmatprep.subr.bf16.mxu0 0
    %1247 = vmatpush2.bf16.msra.mxu0 0
    %1248 = vmatprep.mubr.bf16.mxu0 0
    %1249 = vmatmul.mubr.bf16.gmra.mxu0 %v1207
    %v1250 = vpop.f32.mrf.mxu0
    %v1251 = vadd.f32 0.0, %v1250
    %v1252 = vpop.f32.mrf.mxu0
    %v1253 = vpop.f32.mrf.mxu0
    %v1254 = vpop.f32.mrf.mxu0
    %1255 = vdwg.mxu0
    %v1256 = vmax.f32 %v1206, 1.0
    %v1257 = vrcp.pop %v1256
    %v1258 = vmul.f32 %v1251, %v1257
    %v1259 = vpack.c.bf16 %v1258, %v1258
    %v1260 = vld [vmem:[%s9] sm:$0xf]
    %v1261 = vld [vmem:[%s9 + $0x4] sm:$0xf]
    %v1262 = vld [vmem:[%s9 + $0x8] sm:$0xf]
    %v1263 = vld [vmem:[%s9 + $0xc] sm:$0xf]
    %v1264 = vld [vmem:[%s10] sm:$0x1]
    %v1266 = vlaneseq
    %v1267 = vshrl.u32 %v1266, 7
    %v1268 = vsub.s32 0, %v1267
    %v1269 = vrot.slane %v1264, %v1268
    %v1275 = vunpack.c.l.b16 %v1260
    %v1276 = vunpack.c.l.b16 %v1261
    %v1277 = vunpack.c.l.b16 %v1262
    %v1278 = vunpack.c.l.b16 %v1263
    %v1279 = vpack.c.b16 %v1276, %v1275
    %v1280 = vpack.c.b16 %v1278, %v1277
    %v1284 = vsel %vm529, %v1259, 0
    %1286 = vmatprep.subr.bf16.mxu0 0
    %1287 = vmatpush1.bf16.msra.mxu0 0
    %1288 = vmatprep.subr.bf16.mxu0 0
    %1289 = vmatpush1.bf16.msra.mxu0 0
    %1290 = vmatprep.subr.bf16.mxu0 0
    %1291 = vmatpush1.bf16.msra.mxu0 0
    %1292 = vmatprep.subr.bf16.mxu0 0
    %1293 = vmatpush1.bf16.msra.mxu0 0
    %1294 = vmatprep.subr.bf16.mxu0 0
    %1295 = vmatpush1.bf16.msra.mxu0 0
    %1296 = vmatprep.subr.bf16.mxu0 0
    %1297 = vmatpush1.bf16.msra.mxu0 0
    %1298 = vmatprep.subr.bf16.mxu0 0
    %1299 = vmatpush1.bf16.msra.mxu0 %v1280
    %1300 = vmatprep.subr.bf16.mxu0 0
    %1301 = vmatpush1.bf16.msra.mxu0 %v1279
    %1302 = vmatprep.subr.bf16.mxu0 0
    %1303 = vmatpush2.bf16.msra.mxu0 0
    %1304 = vmatprep.subr.bf16.mxu0 0
    %1305 = vmatpush2.bf16.msra.mxu0 0
    %1306 = vmatprep.subr.bf16.mxu0 0
    %1307 = vmatpush2.bf16.msra.mxu0 0
    %1308 = vmatprep.subr.bf16.mxu0 0
    %1309 = vmatpush2.bf16.msra.mxu0 0
    %1310 = vmatprep.subr.bf16.mxu0 0
    %1311 = vmatpush2.bf16.msra.mxu0 0
    %1312 = vmatprep.subr.bf16.mxu0 0
    %1313 = vmatpush2.bf16.msra.mxu0 0
    %1314 = vmatprep.subr.bf16.mxu0 0
    %1315 = vmatpush2.bf16.msra.mxu0 0
    %1316 = vmatprep.subr.bf16.mxu0 0
    %1317 = vmatpush2.bf16.msra.mxu0 0
    %1318 = vmatprep.mubr.bf16.mxu0 0
    %1319 = vmatmul.mubr.bf16.gmra.mxu0 %v1284
    %v1320 = vpop.f32.mrf.mxu0
    %v1321 = vadd.f32 %v1269, %v1320
    %v1322 = vpop.f32.mrf.mxu0
    %v1323 = vpop.f32.mrf.mxu0
    %v1324 = vpop.f32.mrf.mxu0
    %1325 = vdwg.mxu0
    %1326 = vst [vmem:[#allocation2] sm:$0xff] %v1321
    // Predicated region
    $region46: #{graph_encoder_forward.1} parent=1 // pred_check
      _
    $region47: #{graph_encoder_forward.1} parent=1 // pred_check_branch
      %1328 = sbr.rel (0) target = $region49
    $region48: #{graph_encoder_forward.1} parent=1 // pred_region
      %s1330 = ssub.s32 128, 128
      %1331 = vsyncadd [#allocation3], %s1330
      %s1333 = sshll.u32 [#allocation2], 4
      %s1334 = int_to_ptr.vmem [resolvable:$true] %s1333
      %1336 = dma.vmem_to_hbm [thread:$0]  %s1334, 128, %s11, [#allocation3]
    $region49: #{graph_encoder_forward.1} parent=1 // pred_fallthru
      _
    // Predicated region
    $region50: #{graph_encoder_forward.1} parent=1 // pred_check
      _
    $region51: #{graph_encoder_forward.1} parent=1 // pred_check_branch
      %1338 = sbr.rel (0) target = $region53
    $region52: #{graph_encoder_forward.1} parent=1 // pred_region
      %1339 = dma.done [#allocation3], 128
    $region53: #{graph_encoder_forward.1} parent=1 // pred_fallthru
      _
    %1340 = vsyncpa [#allocation3], 1

</llo_original>
